<compile_context>
chip_gen: v7x
topology: tpu7x:2x2x1
jax: 0.10.0
libtpu: 0.0.40
codegen_flags: <defaults>
</compile_context>

<pallas_src>
import functools

import numpy as np
import jax
import jax.numpy as jnp
from jax import lax
from jax.experimental import pallas as pl
from jax.experimental.pallas import tpu as pltpu


def _adain_kernel(x_ref, scale_ref, shift_ref, o_ref, *, D, H, W):
    """Normalize + affine G whole (D, H, W) volumes per grid step.

    x_ref / o_ref : (G, D, H*W)   lane-dense: H*W on the lane axis
    scale_ref     : (G, 1, 1)     per-volume style scale  (y[:, 0, c])
    shift_ref     : (G, 1, 1)     per-volume style shift  (y[:, 1, c])
    """
    HW = H * W
    x = x_ref[...].astype(jnp.float32)                          # (G, D, HW)

    # Per-volume mean over (D, H, W)  (== PyTorch's mean of means of means).
    row_sum = jnp.sum(x, axis=2, keepdims=True)                  # (G, D, 1)
    mean = jnp.sum(row_sum, axis=1, keepdims=True) * (1.0 / (D * HW))  # (G,1,1)

    # Center by the per-volume mean: std is shift-invariant, and this keeps
    # the single-pass level-1 variance well conditioned for any input mean.
    xc = x - mean                                                # (G, D, HW)

    # ---- level 1: unbiased std over W for every (g, d, h) -----------------
    # Static lane slices (W contiguous lanes per h-group) + exact reductions.
    inv_w = 1.0 / W
    inv_wm1 = 1.0 / max(W - 1, 1)
    s1 = []
    for h in range(H):                       # static unroll; H is small
        xs = xc[:, :, h * W:(h + 1) * W]                         # (G, D, W)
        sw = jnp.sum(xs, axis=-1, keepdims=True)                 # (G, D, 1)
        sq = jnp.sum(xs * xs, axis=-1, keepdims=True)            # (G, D, 1)
        var = (sq - sw * sw * inv_w) * inv_wm1
        s1.append(jnp.sqrt(jnp.maximum(var, 0.0)))

    # ---- level 2: unbiased std over H (two-pass on tiny tensors) ----------
    m1 = sum(s1) * (1.0 / H)                                     # (G, D, 1)
    v2 = sum((t - m1) * (t - m1) for t in s1) * (1.0 / max(H - 1, 1))
    s2 = jnp.sqrt(v2)                                            # (G, D, 1)

    # ---- level 3: unbiased std over D (sublane reduction, two-pass) -------
    m2 = jnp.sum(s2, axis=1, keepdims=True) * (1.0 / D)          # (G, 1, 1)
    d2 = s2 - m2
    v3 = jnp.sum(d2 * d2, axis=1, keepdims=True) * (1.0 / max(D - 1, 1))

    # denom = sqrt(std**2 + 1e-8) with std = sqrt(v3)  ->  sqrt(v3 + 1e-8).
    # Exact math: this is a (G,1,1) tensor, fully off the per-element path.
    inv = 1.0 / jnp.sqrt(v3 + 1e-8)                              # (G, 1, 1)

    # FMA-form affine: per-volume scalars hoisted out of the element path.
    a = scale_ref[...].astype(jnp.float32) * inv                 # (G, 1, 1)
    b = shift_ref[...].astype(jnp.float32) - mean * a            # (G, 1, 1)
    o_ref[...] = (x * a + b).astype(o_ref.dtype)


def _volumes_per_step(bc, vol_bytes, target_bytes=2 << 20):
    """Volumes per grid step.

    Largest divisor of bc whose x-block stays under ~target_bytes, while
    keeping >= 2 grid steps when possible so the double-buffered pipeline has
    overlap and a "parallel" grid axis can be sharded across TensorCores.
    Never falls back to a single full-array block for large tensors.
    """
    g = int(max(1, min(bc, target_bytes // max(vol_bytes, 1))))
    while g > 1 and bc % g:
        g -= 1
    if g == bc and bc > 1:          # force at least 2 grid steps
        g = bc // 2
        while g > 1 and bc % g:
            g -= 1
    return max(g, 1)


def adain3d_forward(x, latent, weight, bias, latent_size):
    """x: (B, C, D, H, W); latent: (B, L); weight: (2C, L); bias: (2C,)."""
    B, C, D, H, W = x.shape
    BC, HW = B * C, H * W
    c_eq = float(np.sqrt(2.0 / latent_size))   # equalized-LR constant

    # Style linear (B x L @ L x 2C): far below one MXU tile, so it stays in
    # the wrapper (XLA fuses it).  precision=HIGHEST keeps it exact f32 - the
    # default TPU matmul precision (bf16 passes) is what blew the tolerance
    # before, since scale multiplies values of magnitude |x-mean|/std ~ 1e2.
    y = lax.dot_general(
        latent.astype(jnp.float32), weight.astype(jnp.float32),
        (((1,), (1,)), ((), ())),
        precision=lax.Precision.HIGHEST,
    ) * c_eq + bias.astype(jnp.float32)[None, :]                 # (B, 2C)
    scale = y[:, :C].reshape(BC, 1, 1)                           # y[:, 0, c]
    shift = y[:, C:].reshape(BC, 1, 1)                           # y[:, 1, c]

    # Lane-dense view: (volume, depth, H*W).  H*W = 128 here gives full-width
    # unmasked vector stores; other spatial sizes still lower (the block's
    # last two dims equal the full array dims) but are only fully lane-dense
    # when H*W is a multiple of 128.
    x3 = x.reshape(BC, D, HW)

    G = _volumes_per_step(BC, D * HW * 4)      # ~2 MiB of f32 per step
    grid = (BC // G,)

    out = pl.pallas_call(
        functools.partial(_adain_kernel, D=D, H=H, W=W),
        out_shape=jax.ShapeDtypeStruct((BC, D, HW), x.dtype),
        grid=grid,
        in_specs=[
            pl.BlockSpec((G, D, HW), lambda i: (i, 0, 0)),       # x volumes
            pl.BlockSpec((G, 1, 1), lambda i: (i, 0, 0)),        # per-volume scale
            pl.BlockSpec((G, 1, 1), lambda i: (i, 0, 0)),        # per-volume shift
        ],
        out_specs=pl.BlockSpec((G, D, HW), lambda i: (i, 0, 0)),
        compiler_params=pltpu.CompilerParams(
            # Disjoint output blocks, no cross-step state -> shard the grid
            # across v7x's two TensorCores; neutral on v5e/v6e.
            dimension_semantics=("parallel",),
            # Double-buffered in+out blocks plus in-kernel f32 temporaries
            # exceed v5e's 16 MiB default scoped VMEM at 2 MiB blocks; 32 MiB
            # is safe on v5e / v6e / v7x alike.
            vmem_limit_bytes=32 * 1024 * 1024,
        ),
    )(x3, scale, shift)
    return out.reshape(B, C, D, H, W)


if __name__ == "__main__":
    B, C, D, H, W = 2, 4, 4, 8, 16
    latent_size = 32

    key = jax.random.PRNGKey(0)
    k1, k2, k3 = jax.random.split(key, 3)
    x = jax.random.normal(k1, (B, C, D, H, W), dtype=jnp.float32)
    latent = jax.random.normal(k2, (B, latent_size), dtype=jnp.float32)

    # nn.Linear(latent_size, 2*C): normal_(weight), bias filled with 1.
    weight = jax.random.normal(k3, (2 * C, latent_size), dtype=jnp.float32)
    bias = jnp.ones((2 * C,), dtype=jnp.float32)

    out = jax.block_until_ready(
        adain3d_forward(x, latent, weight, bias, latent_size))

    # Pure-JAX reference mirroring the PyTorch forward exactly (HIGHEST
    # precision on the linear so the reference itself is not bf16-truncated).
    c_eq = float(np.sqrt(2.0 / latent_size))
    mean = x.mean(axis=(-1, -2, -3), keepdims=True)
    std = jnp.std(
        jnp.std(jnp.std(x, axis=-1, ddof=1), axis=-1, ddof=1), axis=-1, ddof=1
    )[..., None, None, None]
    xn = (x - mean) / jnp.sqrt(std ** 2 + 1e-8)
    y_ref = jnp.dot(latent, (weight * c_eq).T,
                    precision=lax.Precision.HIGHEST) + bias
    y_ref = y_ref.reshape(B, 2, C, 1, 1, 1)
    ref = xn * y_ref[:, 0] + y_ref[:, 1]

    err = float(jnp.max(jnp.abs(out - ref)))
    assert jnp.allclose(out, ref, rtol=2e-3, atol=2e-3), err
    print("KERNEL_OK")
</pallas_src>

<mosaic_0001>
module attributes {stable_mosaic.version = 11 : i64} {
  func.func @_adain_kernel(%arg0: i32, %arg1: memref<4x4x128xf32, #tpu.memory_space<vmem>>, %arg2: memref<4x1x1xf32, #tpu.memory_space<vmem>>, %arg3: memref<4x1x1xf32, #tpu.memory_space<vmem>>, %arg4: memref<4x4x128xf32, #tpu.memory_space<vmem>>) attributes {dimension_semantics = [#tpu.dimension_semantics<parallel>], iteration_bounds = array<i64: 2>, scalar_prefetch = 0 : i64, scratch_operands = 0 : i64, tpu.core_type = #tpu.core_type<tc>, window_params = [{transform_indices = @transform_0, window_bounds = array<i64: 4, 4, 128>}, {transform_indices = @transform_1, window_bounds = array<i64: 4, 1, 1>}, {transform_indices = @transform_2, window_bounds = array<i64: 4, 1, 1>}, {transform_indices = @transform_3, window_bounds = array<i64: 4, 4, 128>}]} {
    %c0 = arith.constant 0 : index
    %c0_0 = arith.constant 0 : index
    %c0_1 = arith.constant 0 : index
    %0 = vector.load %arg1[%c0, %c0_0, %c0_1] : memref<4x4x128xf32, #tpu.memory_space<vmem>>, vector<4x4x128xf32>
    %cst = arith.constant dense<0.000000e+00> : vector<4x4xf32>
    %1 = vector.multi_reduction <add>, %0, %cst [2] : vector<4x4x128xf32> to vector<4x4xf32>
    %2 = vector.shape_cast %1 : vector<4x4xf32> to vector<4x4x1xf32>
    %cst_2 = arith.constant dense<0.000000e+00> : vector<4x1xf32>
    %3 = vector.multi_reduction <add>, %2, %cst_2 [1] : vector<4x4x1xf32> to vector<4x1xf32>
    %4 = vector.shape_cast %3 : vector<4x1xf32> to vector<4x1x1xf32>
    %cst_3 = arith.constant 0.001953125 : f32
    %5 = vector.broadcast %cst_3 : f32 to vector<4x1x1xf32>
    %6 = arith.mulf %4, %5 : vector<4x1x1xf32>
    %7 = vector.broadcast %6 : vector<4x1x1xf32> to vector<4x4x128xf32>
    %8 = arith.subf %0, %7 : vector<4x4x128xf32>
    %9 = vector.extract_strided_slice %8 {offsets = [0, 0, 0], sizes = [4, 4, 16], strides = [1, 1, 1]} : vector<4x4x128xf32> to vector<4x4x16xf32>
    %cst_4 = arith.constant dense<0.000000e+00> : vector<4x4xf32>
    %10 = vector.multi_reduction <add>, %9, %cst_4 [2] : vector<4x4x16xf32> to vector<4x4xf32>
    %11 = vector.shape_cast %10 : vector<4x4xf32> to vector<4x4x1xf32>
    %12 = arith.mulf %9, %9 : vector<4x4x16xf32>
    %cst_5 = arith.constant dense<0.000000e+00> : vector<4x4xf32>
    %13 = vector.multi_reduction <add>, %12, %cst_5 [2] : vector<4x4x16xf32> to vector<4x4xf32>
    %14 = vector.shape_cast %13 : vector<4x4xf32> to vector<4x4x1xf32>
    %15 = arith.mulf %11, %11 : vector<4x4x1xf32>
    %cst_6 = arith.constant 6.250000e-02 : f32
    %16 = vector.broadcast %cst_6 : f32 to vector<4x4x1xf32>
    %17 = arith.mulf %15, %16 : vector<4x4x1xf32>
    %18 = arith.subf %14, %17 : vector<4x4x1xf32>
    %cst_7 = arith.constant 0.0666666701 : f32
    %19 = vector.broadcast %cst_7 : f32 to vector<4x4x1xf32>
    %20 = arith.mulf %18, %19 : vector<4x4x1xf32>
    %cst_8 = arith.constant 0.000000e+00 : f32
    %21 = vector.broadcast %cst_8 : f32 to vector<4x4x1xf32>
    %22 = arith.maximumf %20, %21 : vector<4x4x1xf32>
    %23 = math.sqrt %22 : vector<4x4x1xf32>
    %24 = vector.extract_strided_slice %8 {offsets = [0, 0, 16], sizes = [4, 4, 16], strides = [1, 1, 1]} : vector<4x4x128xf32> to vector<4x4x16xf32>
    %cst_9 = arith.constant dense<0.000000e+00> : vector<4x4xf32>
    %25 = vector.multi_reduction <add>, %24, %cst_9 [2] : vector<4x4x16xf32> to vector<4x4xf32>
    %26 = vector.shape_cast %25 : vector<4x4xf32> to vector<4x4x1xf32>
    %27 = arith.mulf %24, %24 : vector<4x4x16xf32>
    %cst_10 = arith.constant dense<0.000000e+00> : vector<4x4xf32>
    %28 = vector.multi_reduction <add>, %27, %cst_10 [2] : vector<4x4x16xf32> to vector<4x4xf32>
    %29 = vector.shape_cast %28 : vector<4x4xf32> to vector<4x4x1xf32>
    %30 = arith.mulf %26, %26 : vector<4x4x1xf32>
    %cst_11 = arith.constant 6.250000e-02 : f32
    %31 = vector.broadcast %cst_11 : f32 to vector<4x4x1xf32>
    %32 = arith.mulf %30, %31 : vector<4x4x1xf32>
    %33 = arith.subf %29, %32 : vector<4x4x1xf32>
    %cst_12 = arith.constant 0.0666666701 : f32
    %34 = vector.broadcast %cst_12 : f32 to vector<4x4x1xf32>
    %35 = arith.mulf %33, %34 : vector<4x4x1xf32>
    %cst_13 = arith.constant 0.000000e+00 : f32
    %36 = vector.broadcast %cst_13 : f32 to vector<4x4x1xf32>
    %37 = arith.maximumf %35, %36 : vector<4x4x1xf32>
    %38 = math.sqrt %37 : vector<4x4x1xf32>
    %39 = vector.extract_strided_slice %8 {offsets = [0, 0, 32], sizes = [4, 4, 16], strides = [1, 1, 1]} : vector<4x4x128xf32> to vector<4x4x16xf32>
    %cst_14 = arith.constant dense<0.000000e+00> : vector<4x4xf32>
    %40 = vector.multi_reduction <add>, %39, %cst_14 [2] : vector<4x4x16xf32> to vector<4x4xf32>
    %41 = vector.shape_cast %40 : vector<4x4xf32> to vector<4x4x1xf32>
    %42 = arith.mulf %39, %39 : vector<4x4x16xf32>
    %cst_15 = arith.constant dense<0.000000e+00> : vector<4x4xf32>
    %43 = vector.multi_reduction <add>, %42, %cst_15 [2] : vector<4x4x16xf32> to vector<4x4xf32>
    %44 = vector.shape_cast %43 : vector<4x4xf32> to vector<4x4x1xf32>
    %45 = arith.mulf %41, %41 : vector<4x4x1xf32>
    %cst_16 = arith.constant 6.250000e-02 : f32
    %46 = vector.broadcast %cst_16 : f32 to vector<4x4x1xf32>
    %47 = arith.mulf %45, %46 : vector<4x4x1xf32>
    %48 = arith.subf %44, %47 : vector<4x4x1xf32>
    %cst_17 = arith.constant 0.0666666701 : f32
    %49 = vector.broadcast %cst_17 : f32 to vector<4x4x1xf32>
    %50 = arith.mulf %48, %49 : vector<4x4x1xf32>
    %cst_18 = arith.constant 0.000000e+00 : f32
    %51 = vector.broadcast %cst_18 : f32 to vector<4x4x1xf32>
    %52 = arith.maximumf %50, %51 : vector<4x4x1xf32>
    %53 = math.sqrt %52 : vector<4x4x1xf32>
    %54 = vector.extract_strided_slice %8 {offsets = [0, 0, 48], sizes = [4, 4, 16], strides = [1, 1, 1]} : vector<4x4x128xf32> to vector<4x4x16xf32>
    %cst_19 = arith.constant dense<0.000000e+00> : vector<4x4xf32>
    %55 = vector.multi_reduction <add>, %54, %cst_19 [2] : vector<4x4x16xf32> to vector<4x4xf32>
    %56 = vector.shape_cast %55 : vector<4x4xf32> to vector<4x4x1xf32>
    %57 = arith.mulf %54, %54 : vector<4x4x16xf32>
    %cst_20 = arith.constant dense<0.000000e+00> : vector<4x4xf32>
    %58 = vector.multi_reduction <add>, %57, %cst_20 [2] : vector<4x4x16xf32> to vector<4x4xf32>
    %59 = vector.shape_cast %58 : vector<4x4xf32> to vector<4x4x1xf32>
    %60 = arith.mulf %56, %56 : vector<4x4x1xf32>
    %cst_21 = arith.constant 6.250000e-02 : f32
    %61 = vector.broadcast %cst_21 : f32 to vector<4x4x1xf32>
    %62 = arith.mulf %60, %61 : vector<4x4x1xf32>
    %63 = arith.subf %59, %62 : vector<4x4x1xf32>
    %cst_22 = arith.constant 0.0666666701 : f32
    %64 = vector.broadcast %cst_22 : f32 to vector<4x4x1xf32>
    %65 = arith.mulf %63, %64 : vector<4x4x1xf32>
    %cst_23 = arith.constant 0.000000e+00 : f32
    %66 = vector.broadcast %cst_23 : f32 to vector<4x4x1xf32>
    %67 = arith.maximumf %65, %66 : vector<4x4x1xf32>
    %68 = math.sqrt %67 : vector<4x4x1xf32>
    %69 = vector.extract_strided_slice %8 {offsets = [0, 0, 64], sizes = [4, 4, 16], strides = [1, 1, 1]} : vector<4x4x128xf32> to vector<4x4x16xf32>
    %cst_24 = arith.constant dense<0.000000e+00> : vector<4x4xf32>
    %70 = vector.multi_reduction <add>, %69, %cst_24 [2] : vector<4x4x16xf32> to vector<4x4xf32>
    %71 = vector.shape_cast %70 : vector<4x4xf32> to vector<4x4x1xf32>
    %72 = arith.mulf %69, %69 : vector<4x4x16xf32>
    %cst_25 = arith.constant dense<0.000000e+00> : vector<4x4xf32>
    %73 = vector.multi_reduction <add>, %72, %cst_25 [2] : vector<4x4x16xf32> to vector<4x4xf32>
    %74 = vector.shape_cast %73 : vector<4x4xf32> to vector<4x4x1xf32>
    %75 = arith.mulf %71, %71 : vector<4x4x1xf32>
    %cst_26 = arith.constant 6.250000e-02 : f32
    %76 = vector.broadcast %cst_26 : f32 to vector<4x4x1xf32>
    %77 = arith.mulf %75, %76 : vector<4x4x1xf32>
    %78 = arith.subf %74, %77 : vector<4x4x1xf32>
    %cst_27 = arith.constant 0.0666666701 : f32
    %79 = vector.broadcast %cst_27 : f32 to vector<4x4x1xf32>
    %80 = arith.mulf %78, %79 : vector<4x4x1xf32>
    %cst_28 = arith.constant 0.000000e+00 : f32
    %81 = vector.broadcast %cst_28 : f32 to vector<4x4x1xf32>
    %82 = arith.maximumf %80, %81 : vector<4x4x1xf32>
    %83 = math.sqrt %82 : vector<4x4x1xf32>
    %84 = vector.extract_strided_slice %8 {offsets = [0, 0, 80], sizes = [4, 4, 16], strides = [1, 1, 1]} : vector<4x4x128xf32> to vector<4x4x16xf32>
    %cst_29 = arith.constant dense<0.000000e+00> : vector<4x4xf32>
    %85 = vector.multi_reduction <add>, %84, %cst_29 [2] : vector<4x4x16xf32> to vector<4x4xf32>
    %86 = vector.shape_cast %85 : vector<4x4xf32> to vector<4x4x1xf32>
    %87 = arith.mulf %84, %84 : vector<4x4x16xf32>
    %cst_30 = arith.constant dense<0.000000e+00> : vector<4x4xf32>
    %88 = vector.multi_reduction <add>, %87, %cst_30 [2] : vector<4x4x16xf32> to vector<4x4xf32>
    %89 = vector.shape_cast %88 : vector<4x4xf32> to vector<4x4x1xf32>
    %90 = arith.mulf %86, %86 : vector<4x4x1xf32>
    %cst_31 = arith.constant 6.250000e-02 : f32
    %91 = vector.broadcast %cst_31 : f32 to vector<4x4x1xf32>
    %92 = arith.mulf %90, %91 : vector<4x4x1xf32>
    %93 = arith.subf %89, %92 : vector<4x4x1xf32>
    %cst_32 = arith.constant 0.0666666701 : f32
    %94 = vector.broadcast %cst_32 : f32 to vector<4x4x1xf32>
    %95 = arith.mulf %93, %94 : vector<4x4x1xf32>
    %cst_33 = arith.constant 0.000000e+00 : f32
    %96 = vector.broadcast %cst_33 : f32 to vector<4x4x1xf32>
    %97 = arith.maximumf %95, %96 : vector<4x4x1xf32>
    %98 = math.sqrt %97 : vector<4x4x1xf32>
    %99 = vector.extract_strided_slice %8 {offsets = [0, 0, 96], sizes = [4, 4, 16], strides = [1, 1, 1]} : vector<4x4x128xf32> to vector<4x4x16xf32>
    %cst_34 = arith.constant dense<0.000000e+00> : vector<4x4xf32>
    %100 = vector.multi_reduction <add>, %99, %cst_34 [2] : vector<4x4x16xf32> to vector<4x4xf32>
    %101 = vector.shape_cast %100 : vector<4x4xf32> to vector<4x4x1xf32>
    %102 = arith.mulf %99, %99 : vector<4x4x16xf32>
    %cst_35 = arith.constant dense<0.000000e+00> : vector<4x4xf32>
    %103 = vector.multi_reduction <add>, %102, %cst_35 [2] : vector<4x4x16xf32> to vector<4x4xf32>
    %104 = vector.shape_cast %103 : vector<4x4xf32> to vector<4x4x1xf32>
    %105 = arith.mulf %101, %101 : vector<4x4x1xf32>
    %cst_36 = arith.constant 6.250000e-02 : f32
    %106 = vector.broadcast %cst_36 : f32 to vector<4x4x1xf32>
    %107 = arith.mulf %105, %106 : vector<4x4x1xf32>
    %108 = arith.subf %104, %107 : vector<4x4x1xf32>
    %cst_37 = arith.constant 0.0666666701 : f32
    %109 = vector.broadcast %cst_37 : f32 to vector<4x4x1xf32>
    %110 = arith.mulf %108, %109 : vector<4x4x1xf32>
    %cst_38 = arith.constant 0.000000e+00 : f32
    %111 = vector.broadcast %cst_38 : f32 to vector<4x4x1xf32>
    %112 = arith.maximumf %110, %111 : vector<4x4x1xf32>
    %113 = math.sqrt %112 : vector<4x4x1xf32>
    %114 = vector.extract_strided_slice %8 {offsets = [0, 0, 112], sizes = [4, 4, 16], strides = [1, 1, 1]} : vector<4x4x128xf32> to vector<4x4x16xf32>
    %cst_39 = arith.constant dense<0.000000e+00> : vector<4x4xf32>
    %115 = vector.multi_reduction <add>, %114, %cst_39 [2] : vector<4x4x16xf32> to vector<4x4xf32>
    %116 = vector.shape_cast %115 : vector<4x4xf32> to vector<4x4x1xf32>
    %117 = arith.mulf %114, %114 : vector<4x4x16xf32>
    %cst_40 = arith.constant dense<0.000000e+00> : vector<4x4xf32>
    %118 = vector.multi_reduction <add>, %117, %cst_40 [2] : vector<4x4x16xf32> to vector<4x4xf32>
    %119 = vector.shape_cast %118 : vector<4x4xf32> to vector<4x4x1xf32>
    %120 = arith.mulf %116, %116 : vector<4x4x1xf32>
    %cst_41 = arith.constant 6.250000e-02 : f32
    %121 = vector.broadcast %cst_41 : f32 to vector<4x4x1xf32>
    %122 = arith.mulf %120, %121 : vector<4x4x1xf32>
    %123 = arith.subf %119, %122 : vector<4x4x1xf32>
    %cst_42 = arith.constant 0.0666666701 : f32
    %124 = vector.broadcast %cst_42 : f32 to vector<4x4x1xf32>
    %125 = arith.mulf %123, %124 : vector<4x4x1xf32>
    %cst_43 = arith.constant 0.000000e+00 : f32
    %126 = vector.broadcast %cst_43 : f32 to vector<4x4x1xf32>
    %127 = arith.maximumf %125, %126 : vector<4x4x1xf32>
    %128 = math.sqrt %127 : vector<4x4x1xf32>
    %cst_44 = arith.constant 0.000000e+00 : f32
    %129 = vector.broadcast %cst_44 : f32 to vector<4x4x1xf32>
    %130 = arith.addf %129, %23 : vector<4x4x1xf32>
    %131 = arith.addf %130, %38 : vector<4x4x1xf32>
    %132 = arith.addf %131, %53 : vector<4x4x1xf32>
    %133 = arith.addf %132, %68 : vector<4x4x1xf32>
    %134 = arith.addf %133, %83 : vector<4x4x1xf32>
    %135 = arith.addf %134, %98 : vector<4x4x1xf32>
    %136 = arith.addf %135, %113 : vector<4x4x1xf32>
    %137 = arith.addf %136, %128 : vector<4x4x1xf32>
    %cst_45 = arith.constant 1.250000e-01 : f32
    %138 = vector.broadcast %cst_45 : f32 to vector<4x4x1xf32>
    %139 = arith.mulf %137, %138 : vector<4x4x1xf32>
    %140 = arith.subf %23, %139 : vector<4x4x1xf32>
    %141 = arith.subf %23, %139 : vector<4x4x1xf32>
    %142 = arith.mulf %140, %141 : vector<4x4x1xf32>
    %cst_46 = arith.constant 0.000000e+00 : f32
    %143 = vector.broadcast %cst_46 : f32 to vector<4x4x1xf32>
    %144 = arith.addf %143, %142 : vector<4x4x1xf32>
    %145 = arith.subf %38, %139 : vector<4x4x1xf32>
    %146 = arith.subf %38, %139 : vector<4x4x1xf32>
    %147 = arith.mulf %145, %146 : vector<4x4x1xf32>
    %148 = arith.addf %144, %147 : vector<4x4x1xf32>
    %149 = arith.subf %53, %139 : vector<4x4x1xf32>
    %150 = arith.subf %53, %139 : vector<4x4x1xf32>
    %151 = arith.mulf %149, %150 : vector<4x4x1xf32>
    %152 = arith.addf %148, %151 : vector<4x4x1xf32>
    %153 = arith.subf %68, %139 : vector<4x4x1xf32>
    %154 = arith.subf %68, %139 : vector<4x4x1xf32>
    %155 = arith.mulf %153, %154 : vector<4x4x1xf32>
    %156 = arith.addf %152, %155 : vector<4x4x1xf32>
    %157 = arith.subf %83, %139 : vector<4x4x1xf32>
    %158 = arith.subf %83, %139 : vector<4x4x1xf32>
    %159 = arith.mulf %157, %158 : vector<4x4x1xf32>
    %160 = arith.addf %156, %159 : vector<4x4x1xf32>
    %161 = arith.subf %98, %139 : vector<4x4x1xf32>
    %162 = arith.subf %98, %139 : vector<4x4x1xf32>
    %163 = arith.mulf %161, %162 : vector<4x4x1xf32>
    %164 = arith.addf %160, %163 : vector<4x4x1xf32>
    %165 = arith.subf %113, %139 : vector<4x4x1xf32>
    %166 = arith.subf %113, %139 : vector<4x4x1xf32>
    %167 = arith.mulf %165, %166 : vector<4x4x1xf32>
    %168 = arith.addf %164, %167 : vector<4x4x1xf32>
    %169 = arith.subf %128, %139 : vector<4x4x1xf32>
    %170 = arith.subf %128, %139 : vector<4x4x1xf32>
    %171 = arith.mulf %169, %170 : vector<4x4x1xf32>
    %172 = arith.addf %168, %171 : vector<4x4x1xf32>
    %cst_47 = arith.constant 0.142857149 : f32
    %173 = vector.broadcast %cst_47 : f32 to vector<4x4x1xf32>
    %174 = arith.mulf %172, %173 : vector<4x4x1xf32>
    %175 = math.sqrt %174 : vector<4x4x1xf32>
    %cst_48 = arith.constant dense<0.000000e+00> : vector<4x1xf32>
    %176 = vector.multi_reduction <add>, %175, %cst_48 [1] : vector<4x4x1xf32> to vector<4x1xf32>
    %177 = vector.shape_cast %176 : vector<4x1xf32> to vector<4x1x1xf32>
    %cst_49 = arith.constant 2.500000e-01 : f32
    %178 = vector.broadcast %cst_49 : f32 to vector<4x1x1xf32>
    %179 = arith.mulf %177, %178 : vector<4x1x1xf32>
    %180 = vector.broadcast %179 : vector<4x1x1xf32> to vector<4x4x1xf32>
    %181 = arith.subf %175, %180 : vector<4x4x1xf32>
    %182 = arith.mulf %181, %181 : vector<4x4x1xf32>
    %cst_50 = arith.constant dense<0.000000e+00> : vector<4x1xf32>
    %183 = vector.multi_reduction <add>, %182, %cst_50 [1] : vector<4x4x1xf32> to vector<4x1xf32>
    %184 = vector.shape_cast %183 : vector<4x1xf32> to vector<4x1x1xf32>
    %cst_51 = arith.constant 0.333333343 : f32
    %185 = vector.broadcast %cst_51 : f32 to vector<4x1x1xf32>
    %186 = arith.mulf %184, %185 : vector<4x1x1xf32>
    %cst_52 = arith.constant 9.99999993E-9 : f32
    %187 = vector.broadcast %cst_52 : f32 to vector<4x1x1xf32>
    %188 = arith.addf %186, %187 : vector<4x1x1xf32>
    %189 = math.sqrt %188 : vector<4x1x1xf32>
    %cst_53 = arith.constant 1.000000e+00 : f32
    %190 = vector.broadcast %cst_53 : f32 to vector<4x1x1xf32>
    %191 = arith.divf %190, %189 : vector<4x1x1xf32>
    %c0_54 = arith.constant 0 : index
    %c0_55 = arith.constant 0 : index
    %c0_56 = arith.constant 0 : index
    %192 = vector.load %arg2[%c0_54, %c0_55, %c0_56] : memref<4x1x1xf32, #tpu.memory_space<vmem>>, vector<4x1x1xf32>
    %193 = arith.mulf %192, %191 : vector<4x1x1xf32>
    %c0_57 = arith.constant 0 : index
    %c0_58 = arith.constant 0 : index
    %c0_59 = arith.constant 0 : index
    %194 = vector.load %arg3[%c0_57, %c0_58, %c0_59] : memref<4x1x1xf32, #tpu.memory_space<vmem>>, vector<4x1x1xf32>
    %195 = arith.mulf %6, %193 : vector<4x1x1xf32>
    %196 = arith.subf %194, %195 : vector<4x1x1xf32>
    %197 = vector.broadcast %193 : vector<4x1x1xf32> to vector<4x4x128xf32>
    %198 = arith.mulf %0, %197 : vector<4x4x128xf32>
    %199 = vector.broadcast %196 : vector<4x1x1xf32> to vector<4x4x128xf32>
    %200 = arith.addf %198, %199 : vector<4x4x128xf32>
    %c0_60 = arith.constant 0 : index
    %c0_61 = arith.constant 0 : index
    %c0_62 = arith.constant 0 : index
    %201 = vector.load %arg4[%c0_60, %c0_61, %c0_62] : memref<4x4x128xf32, #tpu.memory_space<vmem>>, vector<4x4x128xf32>
    tpu.vector_store %arg4[%c0_60, %c0_61, %c0_62], %200 {strides = array<i32>} : memref<4x4x128xf32, #tpu.memory_space<vmem>>, vector<4x4x128xf32>,
    return
  }
  func.func @transform_0(%arg0: i32) -> (i32, i32, i32) {
    %c0_i32 = arith.constant 0 : i32
    %c0_i32_0 = arith.constant 0 : i32
    %c0_i32_1 = arith.constant 0 : i32
    return %arg0, %c0_i32, %c0_i32_0 : i32, i32, i32
  }
  func.func @transform_1(%arg0: i32) -> (i32, i32, i32) {
    %c0_i32 = arith.constant 0 : i32
    %c0_i32_0 = arith.constant 0 : i32
    %c0_i32_1 = arith.constant 0 : i32
    return %arg0, %c0_i32, %c0_i32_0 : i32, i32, i32
  }
  func.func @transform_2(%arg0: i32) -> (i32, i32, i32) {
    %c0_i32 = arith.constant 0 : i32
    %c0_i32_0 = arith.constant 0 : i32
    %c0_i32_1 = arith.constant 0 : i32
    return %arg0, %c0_i32, %c0_i32_0 : i32, i32, i32
  }
  func.func @transform_3(%arg0: i32) -> (i32, i32, i32) {
    %c0_i32 = arith.constant 0 : i32
    %c0_i32_0 = arith.constant 0 : i32
    %c0_i32_1 = arith.constant 0 : i32
    return %arg0, %c0_i32, %c0_i32_0 : i32, i32, i32
  }
}

</mosaic_0001>

<llo_original>
// kernel: tpu_custom_call.1
$region0: #{tpu_custom_call.1}
  #allocation0 [shape = 'u32[]', space=smem, size = 0x4, offset = 0x4, fixed_abs, tag = 'smem constant byte address 0x4 - core index']
  #allocation1 [shape = 'u32[144,128]{1,0:T(1,128)}', space=vmem, size = 0x12000, scoped, tag = 'internal scratch']
  %s0 = inlined_call_operand.hbm [shape: f32[8,4,128], index: 0, kind: input, shape index: {}]
  %s1 = inlined_call_operand.vmem [shape: f32[8,1,1], index: 1, kind: input, shape index: {}]
  %s2 = inlined_call_operand.vmem [shape: f32[8,1,1], index: 2, kind: input, shape index: {}]
  %s3 = inlined_call_operand.hbm [shape: f32[8,4,128], index: 3, kind: output, shape index: {}]
  %s4 = sld [smem:[#allocation0]]
  $region49: #{tpu_custom_call.1} parent=0
    _
  %s6 = ssub.s32 1, %s4
  %s7 = scalar_select 0, %s6, %s4
  $region1: #{tpu_custom_call.1} parent=0
    #allocation2 [shape = 'u8[16384]{0}', space=vmem, size = 0x4000, scoped, tag = 'input window, operand 0']
    #allocation3 [shape = 's32[2]{0}', space=sflag, size = 0x8, scoped, tag = 'scoped memory for tpu_custom_call.1']
    #allocation4 [shape = 's32[2]{0}', space=sflag, size = 0x8, scoped, tag = 'scoped memory for tpu_custom_call.1']
    #allocation5 [shape = 'u8[16384]{0}', space=vmem, size = 0x4000, scoped, tag = 'output window, operand 0']
    %8 = vsyncpa [#allocation3], 0
    %s9 = scalar_lea.sflag [#allocation3], 1
    %10 = vsyncpa %s9, 0
    %11 = vsyncpa [#allocation4], 0
    %s12 = scalar_lea.sflag [#allocation4], 1
    %13 = vsyncpa %s12, 0
    loop: start=0, step=1, limit=4
    $region2: #{tpu_custom_call.1} parent=1 // loop_pre_header
      _
    $region3: #{tpu_custom_call.1} parent=1 // loop_header
      %s15 = sphi 0, %s19
      %p16 = scmp.ge.s32.totalorder %s15, 4
      %s25 = sphi 0, %s27
      %s28 = sphi 0, %s25
      %s29 = sphi 0, %s28
      %s45 = sphi 0, %s29
      %s51 = sphi 0, %s53
      %s54 = sphi 0, %s51
      %s55 = sphi 0, %s54
      %s71 = sphi 0, %s55
      %s77 = sphi 0, %s79
      %s80 = sphi 0, %s77
      %s81 = sphi 0, %s80
      %s97 = sphi 0, %s81
      %s103 = sphi 0, %s105
      %s106 = sphi 0, %s103
      %s107 = sphi 0, %s106
      %s123 = sphi 0, %s107
    $region4: #{tpu_custom_call.1} parent=1 // loop_header_branch
      %18 = sbr.rel (%p16) target = $region8
    $region5: #{tpu_custom_call.1} parent=1 // loop_body
      %s20 = ssub.s32 %s15, 1
      %s21 = ssub.s32 %s15, 2
      %s22 = sadd.s32 %s15, 1
      %s23 = ssub.s32 %s15, %s22
      %p24 = scmp.eq.s32.totalorder %s23, 0
      %s26 = sadd.s32 %s25, 1
      %s27 = scalar_select %p24, %s25, %s26
      %p30 = pneg %p24
      %p31 = scmp.eq.s32.totalorder %s15, 1
      %p32 = por %p30, %p31
      %p33 = scmp.ne.s32.totalorder %s25, %s28
      %p34 = scmp.eq.s32.totalorder %s15, 0
      %p35 = por %p33, %p34
      %p36 = scmp.ne.s32.totalorder %s25, %s28
      %p37 = scmp.eq.s32.totalorder %s20, 1
      %p38 = por %p36, %p37
      %p39 = scmp.ne.s32.totalorder %s28, %s29
      %p40 = scmp.eq.s32.totalorder %s20, 0
      %p41 = por %p39, %p40
      %p42 = scmp.ne.s32.totalorder %s28, %s29
      %p43 = scmp.eq.s32.totalorder %s21, 1
      %p44 = por %p42, %p43
      %p46 = scmp.ne.s32.totalorder %s29, %s45
      %p47 = scmp.eq.s32.totalorder %s21, 0
      %p48 = por %p46, %p47
      %s49 = ssub.s32 %s15, %s22
      %p50 = scmp.eq.s32.totalorder %s49, 0
      %s52 = sadd.s32 %s51, 1
      %s53 = scalar_select %p50, %s51, %s52
      %p56 = pneg %p50
      %p57 = scmp.eq.s32.totalorder %s15, 1
      %p58 = por %p56, %p57
      %p59 = scmp.ne.s32.totalorder %s51, %s54
      %p60 = scmp.eq.s32.totalorder %s15, 0
      %p61 = por %p59, %p60
      %p62 = scmp.ne.s32.totalorder %s51, %s54
      %p63 = scmp.eq.s32.totalorder %s20, 1
      %p64 = por %p62, %p63
      %p65 = scmp.ne.s32.totalorder %s54, %s55
      %p66 = scmp.eq.s32.totalorder %s20, 0
      %p67 = por %p65, %p66
      %p68 = scmp.ne.s32.totalorder %s54, %s55
      %p69 = scmp.eq.s32.totalorder %s21, 1
      %p70 = por %p68, %p69
      %p72 = scmp.ne.s32.totalorder %s55, %s71
      %p73 = scmp.eq.s32.totalorder %s21, 0
      %p74 = por %p72, %p73
      %s75 = ssub.s32 %s15, %s22
      %p76 = scmp.eq.s32.totalorder %s75, 0
      %s78 = sadd.s32 %s77, 1
      %s79 = scalar_select %p76, %s77, %s78
      %p82 = pneg %p76
      %p83 = scmp.eq.s32.totalorder %s15, 1
      %p84 = por %p82, %p83
      %p85 = scmp.ne.s32.totalorder %s77, %s80
      %p86 = scmp.eq.s32.totalorder %s15, 0
      %p87 = por %p85, %p86
      %p88 = scmp.ne.s32.totalorder %s77, %s80
      %p89 = scmp.eq.s32.totalorder %s20, 1
      %p90 = por %p88, %p89
      %p91 = scmp.ne.s32.totalorder %s80, %s81
      %p92 = scmp.eq.s32.totalorder %s20, 0
      %p93 = por %p91, %p92
      %p94 = scmp.ne.s32.totalorder %s80, %s81
      %p95 = scmp.eq.s32.totalorder %s21, 1
      %p96 = por %p94, %p95
      %p98 = scmp.ne.s32.totalorder %s81, %s97
      %p99 = scmp.eq.s32.totalorder %s21, 0
      %p100 = por %p98, %p99
      %s101 = ssub.s32 %s15, %s22
      %p102 = scmp.eq.s32.totalorder %s101, 0
      %s104 = sadd.s32 %s103, 1
      %s105 = scalar_select %p102, %s103, %s104
      %p108 = pneg %p102
      %p109 = scmp.eq.s32.totalorder %s15, 1
      %p110 = por %p108, %p109
      %p111 = scmp.ne.s32.totalorder %s103, %s106
      %p112 = scmp.eq.s32.totalorder %s15, 0
      %p113 = por %p111, %p112
      %p114 = scmp.ne.s32.totalorder %s103, %s106
      %p115 = scmp.eq.s32.totalorder %s20, 1
      %p116 = por %p114, %p115
      %p117 = scmp.ne.s32.totalorder %s106, %s107
      %p118 = scmp.eq.s32.totalorder %s20, 0
      %p119 = por %p117, %p118
      %p120 = scmp.ne.s32.totalorder %s106, %s107
      %p121 = scmp.eq.s32.totalorder %s21, 1
      %p122 = por %p120, %p121
      %p124 = scmp.ne.s32.totalorder %s107, %s123
      %p125 = scmp.eq.s32.totalorder %s21, 0
      %p126 = por %p124, %p125
      %p127 = scmp.le.s32.totalorder 1, %s15
      %p128 = scmp.lt.s32.totalorder %s15, 3
      %p129 = pnand %p127, %p128
      %p130 = pneg %p129
      // Predicated region
      $region9: #{tpu_custom_call.1} parent=5 // pred_check
        _
      $region10: #{tpu_custom_call.1} parent=5 // pred_check_branch
        %132 = sbr.rel (%p129) target = $region12
      $region11: #{tpu_custom_call.1} parent=5 // pred_region
        %s133 = ssub.s32 %s15, 1
      $region12: #{tpu_custom_call.1} parent=5 // pred_fallthru
        _
      %p134 = scmp.lt.s32.totalorder %s15, 2
      // Predicated region
      $region13: #{tpu_custom_call.1} parent=5 // pred_check
        %p135 = pneg %p134
      $region14: #{tpu_custom_call.1} parent=5 // pred_check_branch
        %137 = sbr.rel (%p135) target = $region16
      $region15: #{tpu_custom_call.1} parent=5 // pred_region
        // Predicated region
        $region17: #{tpu_custom_call.1} parent=15 // pred_check
          %p138 = pneg %p35
        $region18: #{tpu_custom_call.1} parent=15 // pred_check_branch
          %140 = sbr.rel (%p138) target = $region20
        $region19: #{tpu_custom_call.1} parent=15 // pred_region
          %s141 = sand.u32 %s25, 1
          %s142 = scalar_lea.sflag [#allocation3], %s141
          %s143 = sand.u32 %s25, 1
          %s144 = smul.addr %s143, 16
          %s145 = scalar_lea.vmem [#allocation2], %s144
          %s146 = smul.u32 4, %s15
          %s148 = ssub.s32 256, 256
          %149 = vsyncadd %s142, %s148
          %s150 = smul.addr %s146, 64
          %s151 = scalar_lea.hbm %s0, %s150
          %s152 = sshll.u32 %s145, 4
          %s153 = int_to_ptr.vmem [resolvable:$true] %s152
          %158 = dma.hbm_to_vmem [thread:$0]  %s151, 256, %s153, %s142, 64, 64, 4
        $region20: #{tpu_custom_call.1} parent=15 // pred_fallthru
          _
        // Predicated region
        $region21: #{tpu_custom_call.1} parent=15 // pred_check
          %p159 = pneg %p61
        $region22: #{tpu_custom_call.1} parent=15 // pred_check_branch
          %161 = sbr.rel (%p159) target = $region24
        $region23: #{tpu_custom_call.1} parent=15 // pred_region
          %s162 = smul.u32 4, %s15
          %p163 = scmp.lt.s32.totalorder %s162, 7
          %s164 = scalar_select %p163, %s162, 7
          %s165 = scalar_lea.vmem %s1, %s164
          %s166 = smul.u32 4, %s15
        $region24: #{tpu_custom_call.1} parent=15 // pred_fallthru
          _
        // Predicated region
        $region25: #{tpu_custom_call.1} parent=15 // pred_check
          %p167 = pneg %p87
        $region26: #{tpu_custom_call.1} parent=15 // pred_check_branch
          %169 = sbr.rel (%p167) target = $region28
        $region27: #{tpu_custom_call.1} parent=15 // pred_region
          %s170 = smul.u32 4, %s15
          %p171 = scmp.lt.s32.totalorder %s170, 7
          %s172 = scalar_select %p171, %s170, 7
          %s173 = scalar_lea.vmem %s2, %s172
          %s174 = smul.u32 4, %s15
        $region28: #{tpu_custom_call.1} parent=15 // pred_fallthru
          _
      $region16: #{tpu_custom_call.1} parent=5 // pred_fallthru
        _
      %p175 = scmp.le.s32.totalorder 1, %s15
      %p176 = scmp.lt.s32.totalorder %s15, 3
      %p177 = pnand %p175, %p176
      %p178 = pneg %p177
      // Predicated region
      $region29: #{tpu_custom_call.1} parent=5 // pred_check
        _
      $region30: #{tpu_custom_call.1} parent=5 // pred_check_branch
        %180 = sbr.rel (%p177) target = $region32
      $region31: #{tpu_custom_call.1} parent=5 // pred_region
        %s181 = ssub.s32 %s15, 1
        %s182 = sand.u32 %s28, 1
        %s183 = scalar_lea.sflag [#allocation3], %s182
        %s184 = sand.u32 %s28, 1
        %s185 = smul.addr %s184, 16
        %s186 = scalar_lea.vmem [#allocation2], %s185
        // Predicated region
        $region33: #{tpu_custom_call.1} parent=31 // pred_check
          %p187 = pneg %p41
        $region34: #{tpu_custom_call.1} parent=31 // pred_check_branch
          %189 = sbr.rel (%p187) target = $region36
        $region35: #{tpu_custom_call.1} parent=31 // pred_region
          %190 = dma.done %s183, 256
        $region36: #{tpu_custom_call.1} parent=31 // pred_fallthru
          _
        %s191 = sand.u32 %s28, 1
        %s192 = scalar_lea.sflag [#allocation3], %s191
        %s193 = sand.u32 %s28, 1
        %s194 = smul.addr %s193, 16
        %s195 = scalar_lea.vmem [#allocation2], %s194
        %p196 = pneg %p41
        %p197 = pneg %p38
        %s198 = smul.u32 4, %s20
        %p199 = scmp.lt.s32.totalorder %s198, 7
        %s200 = scalar_select %p199, %s198, 7
        %s201 = scalar_lea.vmem %s1, %s200
        %p202 = pneg %p67
        %p203 = pneg %p64
        %s204 = smul.u32 4, %s20
        %p205 = scmp.lt.s32.totalorder %s204, 7
        %s206 = scalar_select %p205, %s204, 7
        %s207 = scalar_lea.vmem %s2, %s206
        %p208 = pneg %p93
        %p209 = pneg %p90
        %p210 = pneg %p119
        %p211 = pneg %p116
        %s212 = sand.u32 %s106, 1
        %s213 = scalar_lea.sflag [#allocation4], %s212
        %s214 = sand.u32 %s106, 1
        %s215 = smul.addr %s214, 16
        %s216 = scalar_lea.vmem [#allocation5], %s215
        %s217 = smul.u32 4, %s20
        %s218 = smul.u32 4, %s20
        %p219 = scmp.lt.s32.totalorder %s218, 7
        %s220 = scalar_select %p219, %s218, 7
        %s221 = scalar_lea.vmem %s1, %s220
        %s222 = smul.u32 4, %s20
        %s223 = smul.u32 4, %s20
        %p224 = scmp.lt.s32.totalorder %s223, 7
        %s225 = scalar_select %p224, %s223, 7
        %s226 = scalar_lea.vmem %s2, %s225
        %s227 = smul.u32 4, %s20
        %s228 = smul.u32 4, %s20
        %v229 = vld [vmem:[%s186] sm:$0xf]
        %v230 = vld [vmem:[%s186 + $0x4] sm:$0xf]
        %v231 = vld [vmem:[%s186 + $0x8] sm:$0xf]
        %v232 = vld [vmem:[%s186 + $0xc] sm:$0xf]
        %vm233 = vcmask 1043456
        %v234 = vsel %vm233, %v229, 0.0
        %235 = vadd.xlane.f32.xlu0 %v234
        %v236 = vpop.xlane.xlu0 %235
        %v237 = vsel %vm233, %v230, 0.0
        %238 = vadd.xlane.f32.xlu0 %v237
        %v239 = vpop.xlane.xlu0 %238
        %v240 = vsel %vm233, %v231, 0.0
        %241 = vadd.xlane.f32.xlu0 %v240
        %v242 = vpop.xlane.xlu0 %241
        %v243 = vsel %vm233, %v232, 0.0
        %244 = vadd.xlane.f32.xlu0 %v243
        %v245 = vpop.xlane.xlu0 %244
        %v246 = vsel %vm233, %v236, 0.0
        %v247 = vrot.slane %v246, 4
        %v248 = vadd.f32 %v246, %v247
        %v249 = vrot.slane %v248, 2
        %v250 = vadd.f32 %v248, %v249
        %v251 = vrot.slane %v250, 1
        %v252 = vadd.f32 %v250, %v251
        %v253 = vsel %vm233, %v239, 0.0
        %v254 = vrot.slane %v253, 4
        %v255 = vadd.f32 %v253, %v254
        %v256 = vrot.slane %v255, 2
        %v257 = vadd.f32 %v255, %v256
        %v258 = vrot.slane %v257, 1
        %v259 = vadd.f32 %v257, %v258
        %v260 = vsel %vm233, %v242, 0.0
        %v261 = vrot.slane %v260, 4
        %v262 = vadd.f32 %v260, %v261
        %v263 = vrot.slane %v262, 2
        %v264 = vadd.f32 %v262, %v263
        %v265 = vrot.slane %v264, 1
        %v266 = vadd.f32 %v264, %v265
        %v267 = vsel %vm233, %v245, 0.0
        %v268 = vrot.slane %v267, 4
        %v269 = vadd.f32 %v267, %v268
        %v270 = vrot.slane %v269, 2
        %v271 = vadd.f32 %v269, %v270
        %v272 = vrot.slane %v271, 1
        %v273 = vadd.f32 %v271, %v272
        %v274 = vmul.f32 %v252, 0.001953125
        %v275 = vmul.f32 %v259, 0.001953125
        %v276 = vmul.f32 %v266, 0.001953125
        %v277 = vmul.f32 %v273, 0.001953125
        %v278 = vsub.f32 %v229, %v274
        %v279 = vsub.f32 %v230, %v275
        %v280 = vsub.f32 %v231, %v276
        %v281 = vsub.f32 %v232, %v277
        %vm282 = vcmask 125952
        %v283 = vsel %vm282, %v278, 0.0
        %284 = vadd.xlane.f32.xlu0 %v283
        %v285 = vpop.xlane.xlu0 %284
        %v286 = vsel %vm282, %v279, 0.0
        %287 = vadd.xlane.f32.xlu0 %v286
        %v288 = vpop.xlane.xlu0 %287
        %v289 = vsel %vm282, %v280, 0.0
        %290 = vadd.xlane.f32.xlu0 %v289
        %v291 = vpop.xlane.xlu0 %290
        %v292 = vsel %vm282, %v281, 0.0
        %293 = vadd.xlane.f32.xlu0 %v292
        %v294 = vpop.xlane.xlu0 %293
        %v295 = vmul.f32 %v278, %v278
        %v296 = vmul.f32 %v279, %v279
        %v297 = vmul.f32 %v280, %v280
        %v298 = vmul.f32 %v281, %v281
        %v299 = vsel %vm282, %v295, 0.0
        %300 = vadd.xlane.f32.xlu0 %v299
        %v301 = vpop.xlane.xlu0 %300
        %v302 = vsel %vm282, %v296, 0.0
        %303 = vadd.xlane.f32.xlu0 %v302
        %v304 = vpop.xlane.xlu0 %303
        %v305 = vsel %vm282, %v297, 0.0
        %306 = vadd.xlane.f32.xlu0 %v305
        %v307 = vpop.xlane.xlu0 %306
        %v308 = vsel %vm282, %v298, 0.0
        %309 = vadd.xlane.f32.xlu0 %v308
        %v310 = vpop.xlane.xlu0 %309
        %v311 = vmul.f32 %v285, %v285
        %v312 = vmul.f32 %v288, %v288
        %v313 = vmul.f32 %v291, %v291
        %v314 = vmul.f32 %v294, %v294
        %v315 = vmul.f32 %v311, 0.0625
        %v316 = vmul.f32 %v312, 0.0625
        %v317 = vmul.f32 %v313, 0.0625
        %v318 = vmul.f32 %v314, 0.0625
        %v319 = vsub.f32 %v301, %v315
        %v320 = vsub.f32 %v304, %v316
        %v321 = vsub.f32 %v307, %v317
        %v322 = vsub.f32 %v310, %v318
        %v323 = vmul.f32 %v319, 0.06666667
        %v324 = vmul.f32 %v320, 0.06666667
        %v325 = vmul.f32 %v321, 0.06666667
        %v326 = vmul.f32 %v322, 0.06666667
        %v327 = vmax.f32 %v323, 0.0
        %v328 = vmax.f32 %v324, 0.0
        %v329 = vmax.f32 %v325, 0.0
        %v330 = vmax.f32 %v326, 0.0
        %v331 = vrsqrt.pop %v327
        %v332 = vmul.f32 %v327, %v331
        %vm333 = vcmp.eq.f32.partialorder %v327, inf
        %v334 = vsel %vm333, %v327, %v332
        %vm335 = vcmp.eq.f32.partialorder %v327, 0.0
        %v336 = vand.u32 %v327, 2147483648
        %v337 = vsel %vm335, %v336, %v334
        %v338 = vrsqrt.pop %v328
        %v339 = vmul.f32 %v328, %v338
        %vm340 = vcmp.eq.f32.partialorder %v328, inf
        %v341 = vsel %vm340, %v328, %v339
        %vm342 = vcmp.eq.f32.partialorder %v328, 0.0
        %v343 = vand.u32 %v328, 2147483648
        %v344 = vsel %vm342, %v343, %v341
        %v345 = vrsqrt.pop %v329
        %v346 = vmul.f32 %v329, %v345
        %vm347 = vcmp.eq.f32.partialorder %v329, inf
        %v348 = vsel %vm347, %v329, %v346
        %vm349 = vcmp.eq.f32.partialorder %v329, 0.0
        %v350 = vand.u32 %v329, 2147483648
        %v351 = vsel %vm349, %v350, %v348
        %v352 = vrsqrt.pop %v330
        %v353 = vmul.f32 %v330, %v352
        %vm354 = vcmp.eq.f32.partialorder %v330, inf
        %v355 = vsel %vm354, %v330, %v353
        %vm356 = vcmp.eq.f32.partialorder %v330, 0.0
        %v357 = vand.u32 %v330, 2147483648
        %v358 = vsel %vm356, %v357, %v355
        %363 = vrot.lane.b32.xlu0 %v278, 112
        %v364 = vpop.permute.xlu0 %363
        %365 = vrot.lane.b32.xlu0 %v279, 112
        %v366 = vpop.permute.xlu0 %365
        %367 = vrot.lane.b32.xlu0 %v280, 112
        %v368 = vpop.permute.xlu0 %367
        %369 = vrot.lane.b32.xlu0 %v281, 112
        %v370 = vpop.permute.xlu0 %369
        %v375 = vsel %vm282, %v364, 0.0
        %376 = vadd.xlane.f32.xlu0 %v375
        %v377 = vpop.xlane.xlu0 %376
        %v378 = vsel %vm282, %v366, 0.0
        %379 = vadd.xlane.f32.xlu0 %v378
        %v380 = vpop.xlane.xlu0 %379
        %v381 = vsel %vm282, %v368, 0.0
        %382 = vadd.xlane.f32.xlu0 %v381
        %v383 = vpop.xlane.xlu0 %382
        %v384 = vsel %vm282, %v370, 0.0
        %385 = vadd.xlane.f32.xlu0 %v384
        %v386 = vpop.xlane.xlu0 %385
        %391 = vrot.lane.b32.xlu0 %v295, 112
        %v392 = vpop.permute.xlu0 %391
        %393 = vrot.lane.b32.xlu0 %v296, 112
        %v394 = vpop.permute.xlu0 %393
        %395 = vrot.lane.b32.xlu0 %v297, 112
        %v396 = vpop.permute.xlu0 %395
        %397 = vrot.lane.b32.xlu0 %v298, 112
        %v398 = vpop.permute.xlu0 %397
        %v403 = vsel %vm282, %v392, 0.0
        %404 = vadd.xlane.f32.xlu0 %v403
        %v405 = vpop.xlane.xlu0 %404
        %v406 = vsel %vm282, %v394, 0.0
        %407 = vadd.xlane.f32.xlu0 %v406
        %v408 = vpop.xlane.xlu0 %407
        %v409 = vsel %vm282, %v396, 0.0
        %410 = vadd.xlane.f32.xlu0 %v409
        %v411 = vpop.xlane.xlu0 %410
        %v412 = vsel %vm282, %v398, 0.0
        %413 = vadd.xlane.f32.xlu0 %v412
        %v414 = vpop.xlane.xlu0 %413
        %v415 = vmul.f32 %v377, %v377
        %v416 = vmul.f32 %v380, %v380
        %v417 = vmul.f32 %v383, %v383
        %v418 = vmul.f32 %v386, %v386
        %v419 = vmul.f32 %v415, 0.0625
        %v420 = vmul.f32 %v416, 0.0625
        %v421 = vmul.f32 %v417, 0.0625
        %v422 = vmul.f32 %v418, 0.0625
        %v423 = vsub.f32 %v405, %v419
        %v424 = vsub.f32 %v408, %v420
        %v425 = vsub.f32 %v411, %v421
        %v426 = vsub.f32 %v414, %v422
        %v427 = vmul.f32 %v423, 0.06666667
        %v428 = vmul.f32 %v424, 0.06666667
        %v429 = vmul.f32 %v425, 0.06666667
        %v430 = vmul.f32 %v426, 0.06666667
        %v431 = vmax.f32 %v427, 0.0
        %v432 = vmax.f32 %v428, 0.0
        %v433 = vmax.f32 %v429, 0.0
        %v434 = vmax.f32 %v430, 0.0
        %v435 = vrsqrt.pop %v431
        %v436 = vmul.f32 %v431, %v435
        %vm437 = vcmp.eq.f32.partialorder %v431, inf
        %v438 = vsel %vm437, %v431, %v436
        %vm439 = vcmp.eq.f32.partialorder %v431, 0.0
        %v440 = vand.u32 %v431, 2147483648
        %v441 = vsel %vm439, %v440, %v438
        %v442 = vrsqrt.pop %v432
        %v443 = vmul.f32 %v432, %v442
        %vm444 = vcmp.eq.f32.partialorder %v432, inf
        %v445 = vsel %vm444, %v432, %v443
        %vm446 = vcmp.eq.f32.partialorder %v432, 0.0
        %v447 = vand.u32 %v432, 2147483648
        %v448 = vsel %vm446, %v447, %v445
        %v449 = vrsqrt.pop %v433
        %v450 = vmul.f32 %v433, %v449
        %vm451 = vcmp.eq.f32.partialorder %v433, inf
        %v452 = vsel %vm451, %v433, %v450
        %vm453 = vcmp.eq.f32.partialorder %v433, 0.0
        %v454 = vand.u32 %v433, 2147483648
        %v455 = vsel %vm453, %v454, %v452
        %v456 = vrsqrt.pop %v434
        %v457 = vmul.f32 %v434, %v456
        %vm458 = vcmp.eq.f32.partialorder %v434, inf
        %v459 = vsel %vm458, %v434, %v457
        %vm460 = vcmp.eq.f32.partialorder %v434, 0.0
        %v461 = vand.u32 %v434, 2147483648
        %v462 = vsel %vm460, %v461, %v459
        %463 = vrot.lane.b32.xlu0 %v278, 96
        %v464 = vpop.permute.xlu0 %463
        %465 = vrot.lane.b32.xlu0 %v279, 96
        %v466 = vpop.permute.xlu0 %465
        %467 = vrot.lane.b32.xlu0 %v280, 96
        %v468 = vpop.permute.xlu0 %467
        %469 = vrot.lane.b32.xlu0 %v281, 96
        %v470 = vpop.permute.xlu0 %469
        %v475 = vsel %vm282, %v464, 0.0
        %476 = vadd.xlane.f32.xlu0 %v475
        %v477 = vpop.xlane.xlu0 %476
        %v478 = vsel %vm282, %v466, 0.0
        %479 = vadd.xlane.f32.xlu0 %v478
        %v480 = vpop.xlane.xlu0 %479
        %v481 = vsel %vm282, %v468, 0.0
        %482 = vadd.xlane.f32.xlu0 %v481
        %v483 = vpop.xlane.xlu0 %482
        %v484 = vsel %vm282, %v470, 0.0
        %485 = vadd.xlane.f32.xlu0 %v484
        %v486 = vpop.xlane.xlu0 %485
        %487 = vrot.lane.b32.xlu0 %v295, 96
        %v488 = vpop.permute.xlu0 %487
        %489 = vrot.lane.b32.xlu0 %v296, 96
        %v490 = vpop.permute.xlu0 %489
        %491 = vrot.lane.b32.xlu0 %v297, 96
        %v492 = vpop.permute.xlu0 %491
        %493 = vrot.lane.b32.xlu0 %v298, 96
        %v494 = vpop.permute.xlu0 %493
        %v499 = vsel %vm282, %v488, 0.0
        %500 = vadd.xlane.f32.xlu0 %v499
        %v501 = vpop.xlane.xlu0 %500
        %v502 = vsel %vm282, %v490, 0.0
        %503 = vadd.xlane.f32.xlu0 %v502
        %v504 = vpop.xlane.xlu0 %503
        %v505 = vsel %vm282, %v492, 0.0
        %506 = vadd.xlane.f32.xlu0 %v505
        %v507 = vpop.xlane.xlu0 %506
        %v508 = vsel %vm282, %v494, 0.0
        %509 = vadd.xlane.f32.xlu0 %v508
        %v510 = vpop.xlane.xlu0 %509
        %v511 = vmul.f32 %v477, %v477
        %v512 = vmul.f32 %v480, %v480
        %v513 = vmul.f32 %v483, %v483
        %v514 = vmul.f32 %v486, %v486
        %v515 = vmul.f32 %v511, 0.0625
        %v516 = vmul.f32 %v512, 0.0625
        %v517 = vmul.f32 %v513, 0.0625
        %v518 = vmul.f32 %v514, 0.0625
        %v519 = vsub.f32 %v501, %v515
        %v520 = vsub.f32 %v504, %v516
        %v521 = vsub.f32 %v507, %v517
        %v522 = vsub.f32 %v510, %v518
        %v523 = vmul.f32 %v519, 0.06666667
        %v524 = vmul.f32 %v520, 0.06666667
        %v525 = vmul.f32 %v521, 0.06666667
        %v526 = vmul.f32 %v522, 0.06666667
        %v527 = vmax.f32 %v523, 0.0
        %v528 = vmax.f32 %v524, 0.0
        %v529 = vmax.f32 %v525, 0.0
        %v530 = vmax.f32 %v526, 0.0
        %v531 = vrsqrt.pop %v527
        %v532 = vmul.f32 %v527, %v531
        %vm533 = vcmp.eq.f32.partialorder %v527, inf
        %v534 = vsel %vm533, %v527, %v532
        %vm535 = vcmp.eq.f32.partialorder %v527, 0.0
        %v536 = vand.u32 %v527, 2147483648
        %v537 = vsel %vm535, %v536, %v534
        %v538 = vrsqrt.pop %v528
        %v539 = vmul.f32 %v528, %v538
        %vm540 = vcmp.eq.f32.partialorder %v528, inf
        %v541 = vsel %vm540, %v528, %v539
        %vm542 = vcmp.eq.f32.partialorder %v528, 0.0
        %v543 = vand.u32 %v528, 2147483648
        %v544 = vsel %vm542, %v543, %v541
        %v545 = vrsqrt.pop %v529
        %v546 = vmul.f32 %v529, %v545
        %vm547 = vcmp.eq.f32.partialorder %v529, inf
        %v548 = vsel %vm547, %v529, %v546
        %vm549 = vcmp.eq.f32.partialorder %v529, 0.0
        %v550 = vand.u32 %v529, 2147483648
        %v551 = vsel %vm549, %v550, %v548
        %v552 = vrsqrt.pop %v530
        %v553 = vmul.f32 %v530, %v552
        %vm554 = vcmp.eq.f32.partialorder %v530, inf
        %v555 = vsel %vm554, %v530, %v553
        %vm556 = vcmp.eq.f32.partialorder %v530, 0.0
        %v557 = vand.u32 %v530, 2147483648
        %v558 = vsel %vm556, %v557, %v555
        %559 = vrot.lane.b32.xlu0 %v278, 80
        %v560 = vpop.permute.xlu0 %559
        %561 = vrot.lane.b32.xlu0 %v279, 80
        %v562 = vpop.permute.xlu0 %561
        %563 = vrot.lane.b32.xlu0 %v280, 80
        %v564 = vpop.permute.xlu0 %563
        %565 = vrot.lane.b32.xlu0 %v281, 80
        %v566 = vpop.permute.xlu0 %565
        %v571 = vsel %vm282, %v560, 0.0
        %572 = vadd.xlane.f32.xlu0 %v571
        %v573 = vpop.xlane.xlu0 %572
        %v574 = vsel %vm282, %v562, 0.0
        %575 = vadd.xlane.f32.xlu0 %v574
        %v576 = vpop.xlane.xlu0 %575
        %v577 = vsel %vm282, %v564, 0.0
        %578 = vadd.xlane.f32.xlu0 %v577
        %v579 = vpop.xlane.xlu0 %578
        %v580 = vsel %vm282, %v566, 0.0
        %581 = vadd.xlane.f32.xlu0 %v580
        %v582 = vpop.xlane.xlu0 %581
        %583 = vrot.lane.b32.xlu0 %v295, 80
        %v584 = vpop.permute.xlu0 %583
        %585 = vrot.lane.b32.xlu0 %v296, 80
        %v586 = vpop.permute.xlu0 %585
        %587 = vrot.lane.b32.xlu0 %v297, 80
        %v588 = vpop.permute.xlu0 %587
        %589 = vrot.lane.b32.xlu0 %v298, 80
        %v590 = vpop.permute.xlu0 %589
        %v595 = vsel %vm282, %v584, 0.0
        %596 = vadd.xlane.f32.xlu0 %v595
        %v597 = vpop.xlane.xlu0 %596
        %v598 = vsel %vm282, %v586, 0.0
        %599 = vadd.xlane.f32.xlu0 %v598
        %v600 = vpop.xlane.xlu0 %599
        %v601 = vsel %vm282, %v588, 0.0
        %602 = vadd.xlane.f32.xlu0 %v601
        %v603 = vpop.xlane.xlu0 %602
        %v604 = vsel %vm282, %v590, 0.0
        %605 = vadd.xlane.f32.xlu0 %v604
        %v606 = vpop.xlane.xlu0 %605
        %v607 = vmul.f32 %v573, %v573
        %v608 = vmul.f32 %v576, %v576
        %v609 = vmul.f32 %v579, %v579
        %v610 = vmul.f32 %v582, %v582
        %v611 = vmul.f32 %v607, 0.0625
        %v612 = vmul.f32 %v608, 0.0625
        %v613 = vmul.f32 %v609, 0.0625
        %v614 = vmul.f32 %v610, 0.0625
        %v615 = vsub.f32 %v597, %v611
        %v616 = vsub.f32 %v600, %v612
        %v617 = vsub.f32 %v603, %v613
        %v618 = vsub.f32 %v606, %v614
        %v619 = vmul.f32 %v615, 0.06666667
        %v620 = vmul.f32 %v616, 0.06666667
        %v621 = vmul.f32 %v617, 0.06666667
        %v622 = vmul.f32 %v618, 0.06666667
        %v623 = vmax.f32 %v619, 0.0
        %v624 = vmax.f32 %v620, 0.0
        %v625 = vmax.f32 %v621, 0.0
        %v626 = vmax.f32 %v622, 0.0
        %v627 = vrsqrt.pop %v623
        %v628 = vmul.f32 %v623, %v627
        %vm629 = vcmp.eq.f32.partialorder %v623, inf
        %v630 = vsel %vm629, %v623, %v628
        %vm631 = vcmp.eq.f32.partialorder %v623, 0.0
        %v632 = vand.u32 %v623, 2147483648
        %v633 = vsel %vm631, %v632, %v630
        %v634 = vrsqrt.pop %v624
        %v635 = vmul.f32 %v624, %v634
        %vm636 = vcmp.eq.f32.partialorder %v624, inf
        %v637 = vsel %vm636, %v624, %v635
        %vm638 = vcmp.eq.f32.partialorder %v624, 0.0
        %v639 = vand.u32 %v624, 2147483648
        %v640 = vsel %vm638, %v639, %v637
        %v641 = vrsqrt.pop %v625
        %v642 = vmul.f32 %v625, %v641
        %vm643 = vcmp.eq.f32.partialorder %v625, inf
        %v644 = vsel %vm643, %v625, %v642
        %vm645 = vcmp.eq.f32.partialorder %v625, 0.0
        %v646 = vand.u32 %v625, 2147483648
        %v647 = vsel %vm645, %v646, %v644
        %v648 = vrsqrt.pop %v626
        %v649 = vmul.f32 %v626, %v648
        %vm650 = vcmp.eq.f32.partialorder %v626, inf
        %v651 = vsel %vm650, %v626, %v649
        %vm652 = vcmp.eq.f32.partialorder %v626, 0.0
        %v653 = vand.u32 %v626, 2147483648
        %v654 = vsel %vm652, %v653, %v651
        %655 = vrot.lane.b32.xlu0 %v278, 64
        %v656 = vpop.permute.xlu0 %655
        %657 = vrot.lane.b32.xlu0 %v279, 64
        %v658 = vpop.permute.xlu0 %657
        %659 = vrot.lane.b32.xlu0 %v280, 64
        %v660 = vpop.permute.xlu0 %659
        %661 = vrot.lane.b32.xlu0 %v281, 64
        %v662 = vpop.permute.xlu0 %661
        %v667 = vsel %vm282, %v656, 0.0
        %668 = vadd.xlane.f32.xlu0 %v667
        %v669 = vpop.xlane.xlu0 %668
        %v670 = vsel %vm282, %v658, 0.0
        %671 = vadd.xlane.f32.xlu0 %v670
        %v672 = vpop.xlane.xlu0 %671
        %v673 = vsel %vm282, %v660, 0.0
        %674 = vadd.xlane.f32.xlu0 %v673
        %v675 = vpop.xlane.xlu0 %674
        %v676 = vsel %vm282, %v662, 0.0
        %677 = vadd.xlane.f32.xlu0 %v676
        %v678 = vpop.xlane.xlu0 %677
        %679 = vrot.lane.b32.xlu0 %v295, 64
        %v680 = vpop.permute.xlu0 %679
        %681 = vrot.lane.b32.xlu0 %v296, 64
        %v682 = vpop.permute.xlu0 %681
        %683 = vrot.lane.b32.xlu0 %v297, 64
        %v684 = vpop.permute.xlu0 %683
        %685 = vrot.lane.b32.xlu0 %v298, 64
        %v686 = vpop.permute.xlu0 %685
        %v691 = vsel %vm282, %v680, 0.0
        %692 = vadd.xlane.f32.xlu0 %v691
        %v693 = vpop.xlane.xlu0 %692
        %v694 = vsel %vm282, %v682, 0.0
        %695 = vadd.xlane.f32.xlu0 %v694
        %v696 = vpop.xlane.xlu0 %695
        %v697 = vsel %vm282, %v684, 0.0
        %698 = vadd.xlane.f32.xlu0 %v697
        %v699 = vpop.xlane.xlu0 %698
        %v700 = vsel %vm282, %v686, 0.0
        %701 = vadd.xlane.f32.xlu0 %v700
        %v702 = vpop.xlane.xlu0 %701
        %v703 = vmul.f32 %v669, %v669
        %v704 = vmul.f32 %v672, %v672
        %v705 = vmul.f32 %v675, %v675
        %v706 = vmul.f32 %v678, %v678
        %v707 = vmul.f32 %v703, 0.0625
        %v708 = vmul.f32 %v704, 0.0625
        %v709 = vmul.f32 %v705, 0.0625
        %v710 = vmul.f32 %v706, 0.0625
        %v711 = vsub.f32 %v693, %v707
        %v712 = vsub.f32 %v696, %v708
        %v713 = vsub.f32 %v699, %v709
        %v714 = vsub.f32 %v702, %v710
        %v715 = vmul.f32 %v711, 0.06666667
        %v716 = vmul.f32 %v712, 0.06666667
        %v717 = vmul.f32 %v713, 0.06666667
        %v718 = vmul.f32 %v714, 0.06666667
        %v719 = vmax.f32 %v715, 0.0
        %v720 = vmax.f32 %v716, 0.0
        %v721 = vmax.f32 %v717, 0.0
        %v722 = vmax.f32 %v718, 0.0
        %v723 = vrsqrt.pop %v719
        %v724 = vmul.f32 %v719, %v723
        %vm725 = vcmp.eq.f32.partialorder %v719, inf
        %v726 = vsel %vm725, %v719, %v724
        %vm727 = vcmp.eq.f32.partialorder %v719, 0.0
        %v728 = vand.u32 %v719, 2147483648
        %v729 = vsel %vm727, %v728, %v726
        %v730 = vrsqrt.pop %v720
        %v731 = vmul.f32 %v720, %v730
        %vm732 = vcmp.eq.f32.partialorder %v720, inf
        %v733 = vsel %vm732, %v720, %v731
        %vm734 = vcmp.eq.f32.partialorder %v720, 0.0
        %v735 = vand.u32 %v720, 2147483648
        %v736 = vsel %vm734, %v735, %v733
        %v737 = vrsqrt.pop %v721
        %v738 = vmul.f32 %v721, %v737
        %vm739 = vcmp.eq.f32.partialorder %v721, inf
        %v740 = vsel %vm739, %v721, %v738
        %vm741 = vcmp.eq.f32.partialorder %v721, 0.0
        %v742 = vand.u32 %v721, 2147483648
        %v743 = vsel %vm741, %v742, %v740
        %v744 = vrsqrt.pop %v722
        %v745 = vmul.f32 %v722, %v744
        %vm746 = vcmp.eq.f32.partialorder %v722, inf
        %v747 = vsel %vm746, %v722, %v745
        %vm748 = vcmp.eq.f32.partialorder %v722, 0.0
        %v749 = vand.u32 %v722, 2147483648
        %v750 = vsel %vm748, %v749, %v747
        %751 = vrot.lane.b32.xlu0 %v278, 48
        %v752 = vpop.permute.xlu0 %751
        %753 = vrot.lane.b32.xlu0 %v279, 48
        %v754 = vpop.permute.xlu0 %753
        %755 = vrot.lane.b32.xlu0 %v280, 48
        %v756 = vpop.permute.xlu0 %755
        %757 = vrot.lane.b32.xlu0 %v281, 48
        %v758 = vpop.permute.xlu0 %757
        %v763 = vsel %vm282, %v752, 0.0
        %764 = vadd.xlane.f32.xlu0 %v763
        %v765 = vpop.xlane.xlu0 %764
        %v766 = vsel %vm282, %v754, 0.0
        %767 = vadd.xlane.f32.xlu0 %v766
        %v768 = vpop.xlane.xlu0 %767
        %v769 = vsel %vm282, %v756, 0.0
        %770 = vadd.xlane.f32.xlu0 %v769
        %v771 = vpop.xlane.xlu0 %770
        %v772 = vsel %vm282, %v758, 0.0
        %773 = vadd.xlane.f32.xlu0 %v772
        %v774 = vpop.xlane.xlu0 %773
        %775 = vrot.lane.b32.xlu0 %v295, 48
        %v776 = vpop.permute.xlu0 %775
        %777 = vrot.lane.b32.xlu0 %v296, 48
        %v778 = vpop.permute.xlu0 %777
        %779 = vrot.lane.b32.xlu0 %v297, 48
        %v780 = vpop.permute.xlu0 %779
        %781 = vrot.lane.b32.xlu0 %v298, 48
        %v782 = vpop.permute.xlu0 %781
        %v787 = vsel %vm282, %v776, 0.0
        %788 = vadd.xlane.f32.xlu0 %v787
        %v789 = vpop.xlane.xlu0 %788
        %v790 = vsel %vm282, %v778, 0.0
        %791 = vadd.xlane.f32.xlu0 %v790
        %v792 = vpop.xlane.xlu0 %791
        %v793 = vsel %vm282, %v780, 0.0
        %794 = vadd.xlane.f32.xlu0 %v793
        %v795 = vpop.xlane.xlu0 %794
        %v796 = vsel %vm282, %v782, 0.0
        %797 = vadd.xlane.f32.xlu0 %v796
        %v798 = vpop.xlane.xlu0 %797
        %v799 = vmul.f32 %v765, %v765
        %v800 = vmul.f32 %v768, %v768
        %v801 = vmul.f32 %v771, %v771
        %v802 = vmul.f32 %v774, %v774
        %v803 = vmul.f32 %v799, 0.0625
        %v804 = vmul.f32 %v800, 0.0625
        %v805 = vmul.f32 %v801, 0.0625
        %v806 = vmul.f32 %v802, 0.0625
        %v807 = vsub.f32 %v789, %v803
        %v808 = vsub.f32 %v792, %v804
        %v809 = vsub.f32 %v795, %v805
        %v810 = vsub.f32 %v798, %v806
        %v811 = vmul.f32 %v807, 0.06666667
        %v812 = vmul.f32 %v808, 0.06666667
        %v813 = vmul.f32 %v809, 0.06666667
        %v814 = vmul.f32 %v810, 0.06666667
        %v815 = vmax.f32 %v811, 0.0
        %v816 = vmax.f32 %v812, 0.0
        %v817 = vmax.f32 %v813, 0.0
        %v818 = vmax.f32 %v814, 0.0
        %v819 = vrsqrt.pop %v815
        %v820 = vmul.f32 %v815, %v819
        %vm821 = vcmp.eq.f32.partialorder %v815, inf
        %v822 = vsel %vm821, %v815, %v820
        %vm823 = vcmp.eq.f32.partialorder %v815, 0.0
        %v824 = vand.u32 %v815, 2147483648
        %v825 = vsel %vm823, %v824, %v822
        %v826 = vrsqrt.pop %v816
        %v827 = vmul.f32 %v816, %v826
        %vm828 = vcmp.eq.f32.partialorder %v816, inf
        %v829 = vsel %vm828, %v816, %v827
        %vm830 = vcmp.eq.f32.partialorder %v816, 0.0
        %v831 = vand.u32 %v816, 2147483648
        %v832 = vsel %vm830, %v831, %v829
        %v833 = vrsqrt.pop %v817
        %v834 = vmul.f32 %v817, %v833
        %vm835 = vcmp.eq.f32.partialorder %v817, inf
        %v836 = vsel %vm835, %v817, %v834
        %vm837 = vcmp.eq.f32.partialorder %v817, 0.0
        %v838 = vand.u32 %v817, 2147483648
        %v839 = vsel %vm837, %v838, %v836
        %v840 = vrsqrt.pop %v818
        %v841 = vmul.f32 %v818, %v840
        %vm842 = vcmp.eq.f32.partialorder %v818, inf
        %v843 = vsel %vm842, %v818, %v841
        %vm844 = vcmp.eq.f32.partialorder %v818, 0.0
        %v845 = vand.u32 %v818, 2147483648
        %v846 = vsel %vm844, %v845, %v843
        %847 = vrot.lane.b32.xlu0 %v278, 32
        %v848 = vpop.permute.xlu0 %847
        %849 = vrot.lane.b32.xlu0 %v279, 32
        %v850 = vpop.permute.xlu0 %849
        %851 = vrot.lane.b32.xlu0 %v280, 32
        %v852 = vpop.permute.xlu0 %851
        %853 = vrot.lane.b32.xlu0 %v281, 32
        %v854 = vpop.permute.xlu0 %853
        %v859 = vsel %vm282, %v848, 0.0
        %860 = vadd.xlane.f32.xlu0 %v859
        %v861 = vpop.xlane.xlu0 %860
        %v862 = vsel %vm282, %v850, 0.0
        %863 = vadd.xlane.f32.xlu0 %v862
        %v864 = vpop.xlane.xlu0 %863
        %v865 = vsel %vm282, %v852, 0.0
        %866 = vadd.xlane.f32.xlu0 %v865
        %v867 = vpop.xlane.xlu0 %866
        %v868 = vsel %vm282, %v854, 0.0
        %869 = vadd.xlane.f32.xlu0 %v868
        %v870 = vpop.xlane.xlu0 %869
        %871 = vrot.lane.b32.xlu0 %v295, 32
        %v872 = vpop.permute.xlu0 %871
        %873 = vrot.lane.b32.xlu0 %v296, 32
        %v874 = vpop.permute.xlu0 %873
        %875 = vrot.lane.b32.xlu0 %v297, 32
        %v876 = vpop.permute.xlu0 %875
        %877 = vrot.lane.b32.xlu0 %v298, 32
        %v878 = vpop.permute.xlu0 %877
        %v883 = vsel %vm282, %v872, 0.0
        %884 = vadd.xlane.f32.xlu0 %v883
        %v885 = vpop.xlane.xlu0 %884
        %v886 = vsel %vm282, %v874, 0.0
        %887 = vadd.xlane.f32.xlu0 %v886
        %v888 = vpop.xlane.xlu0 %887
        %v889 = vsel %vm282, %v876, 0.0
        %890 = vadd.xlane.f32.xlu0 %v889
        %v891 = vpop.xlane.xlu0 %890
        %v892 = vsel %vm282, %v878, 0.0
        %893 = vadd.xlane.f32.xlu0 %v892
        %v894 = vpop.xlane.xlu0 %893
        %v895 = vmul.f32 %v861, %v861
        %v896 = vmul.f32 %v864, %v864
        %v897 = vmul.f32 %v867, %v867
        %v898 = vmul.f32 %v870, %v870
        %v899 = vmul.f32 %v895, 0.0625
        %v900 = vmul.f32 %v896, 0.0625
        %v901 = vmul.f32 %v897, 0.0625
        %v902 = vmul.f32 %v898, 0.0625
        %v903 = vsub.f32 %v885, %v899
        %v904 = vsub.f32 %v888, %v900
        %v905 = vsub.f32 %v891, %v901
        %v906 = vsub.f32 %v894, %v902
        %v907 = vmul.f32 %v903, 0.06666667
        %v908 = vmul.f32 %v904, 0.06666667
        %v909 = vmul.f32 %v905, 0.06666667
        %v910 = vmul.f32 %v906, 0.06666667
        %v911 = vmax.f32 %v907, 0.0
        %v912 = vmax.f32 %v908, 0.0
        %v913 = vmax.f32 %v909, 0.0
        %v914 = vmax.f32 %v910, 0.0
        %v915 = vrsqrt.pop %v911
        %v916 = vmul.f32 %v911, %v915
        %vm917 = vcmp.eq.f32.partialorder %v911, inf
        %v918 = vsel %vm917, %v911, %v916
        %vm919 = vcmp.eq.f32.partialorder %v911, 0.0
        %v920 = vand.u32 %v911, 2147483648
        %v921 = vsel %vm919, %v920, %v918
        %v922 = vrsqrt.pop %v912
        %v923 = vmul.f32 %v912, %v922
        %vm924 = vcmp.eq.f32.partialorder %v912, inf
        %v925 = vsel %vm924, %v912, %v923
        %vm926 = vcmp.eq.f32.partialorder %v912, 0.0
        %v927 = vand.u32 %v912, 2147483648
        %v928 = vsel %vm926, %v927, %v925
        %v929 = vrsqrt.pop %v913
        %v930 = vmul.f32 %v913, %v929
        %vm931 = vcmp.eq.f32.partialorder %v913, inf
        %v932 = vsel %vm931, %v913, %v930
        %vm933 = vcmp.eq.f32.partialorder %v913, 0.0
        %v934 = vand.u32 %v913, 2147483648
        %v935 = vsel %vm933, %v934, %v932
        %v936 = vrsqrt.pop %v914
        %v937 = vmul.f32 %v914, %v936
        %vm938 = vcmp.eq.f32.partialorder %v914, inf
        %v939 = vsel %vm938, %v914, %v937
        %vm940 = vcmp.eq.f32.partialorder %v914, 0.0
        %v941 = vand.u32 %v914, 2147483648
        %v942 = vsel %vm940, %v941, %v939
        %943 = vrot.lane.b32.xlu0 %v278, 16
        %v944 = vpop.permute.xlu0 %943
        %945 = vrot.lane.b32.xlu0 %v279, 16
        %v946 = vpop.permute.xlu0 %945
        %947 = vrot.lane.b32.xlu0 %v280, 16
        %v948 = vpop.permute.xlu0 %947
        %949 = vrot.lane.b32.xlu0 %v281, 16
        %v950 = vpop.permute.xlu0 %949
        %v955 = vsel %vm282, %v944, 0.0
        %956 = vadd.xlane.f32.xlu0 %v955
        %v957 = vpop.xlane.xlu0 %956
        %v958 = vsel %vm282, %v946, 0.0
        %959 = vadd.xlane.f32.xlu0 %v958
        %v960 = vpop.xlane.xlu0 %959
        %v961 = vsel %vm282, %v948, 0.0
        %962 = vadd.xlane.f32.xlu0 %v961
        %v963 = vpop.xlane.xlu0 %962
        %v964 = vsel %vm282, %v950, 0.0
        %965 = vadd.xlane.f32.xlu0 %v964
        %v966 = vpop.xlane.xlu0 %965
        %967 = vrot.lane.b32.xlu0 %v295, 16
        %v968 = vpop.permute.xlu0 %967
        %969 = vrot.lane.b32.xlu0 %v296, 16
        %v970 = vpop.permute.xlu0 %969
        %971 = vrot.lane.b32.xlu0 %v297, 16
        %v972 = vpop.permute.xlu0 %971
        %973 = vrot.lane.b32.xlu0 %v298, 16
        %v974 = vpop.permute.xlu0 %973
        %v979 = vsel %vm282, %v968, 0.0
        %980 = vadd.xlane.f32.xlu0 %v979
        %v981 = vpop.xlane.xlu0 %980
        %v982 = vsel %vm282, %v970, 0.0
        %983 = vadd.xlane.f32.xlu0 %v982
        %v984 = vpop.xlane.xlu0 %983
        %v985 = vsel %vm282, %v972, 0.0
        %986 = vadd.xlane.f32.xlu0 %v985
        %v987 = vpop.xlane.xlu0 %986
        %v988 = vsel %vm282, %v974, 0.0
        %989 = vadd.xlane.f32.xlu0 %v988
        %v990 = vpop.xlane.xlu0 %989
        %v991 = vmul.f32 %v957, %v957
        %v992 = vmul.f32 %v960, %v960
        %v993 = vmul.f32 %v963, %v963
        %v994 = vmul.f32 %v966, %v966
        %v995 = vmul.f32 %v991, 0.0625
        %v996 = vmul.f32 %v992, 0.0625
        %v997 = vmul.f32 %v993, 0.0625
        %v998 = vmul.f32 %v994, 0.0625
        %v999 = vsub.f32 %v981, %v995
        %v1000 = vsub.f32 %v984, %v996
        %v1001 = vsub.f32 %v987, %v997
        %v1002 = vsub.f32 %v990, %v998
        %v1003 = vmul.f32 %v999, 0.06666667
        %v1004 = vmul.f32 %v1000, 0.06666667
        %v1005 = vmul.f32 %v1001, 0.06666667
        %v1006 = vmul.f32 %v1002, 0.06666667
        %v1007 = vmax.f32 %v1003, 0.0
        %v1008 = vmax.f32 %v1004, 0.0
        %v1009 = vmax.f32 %v1005, 0.0
        %v1010 = vmax.f32 %v1006, 0.0
        %v1011 = vrsqrt.pop %v1007
        %v1012 = vmul.f32 %v1007, %v1011
        %vm1013 = vcmp.eq.f32.partialorder %v1007, inf
        %v1014 = vsel %vm1013, %v1007, %v1012
        %vm1015 = vcmp.eq.f32.partialorder %v1007, 0.0
        %v1016 = vand.u32 %v1007, 2147483648
        %v1017 = vsel %vm1015, %v1016, %v1014
        %v1018 = vrsqrt.pop %v1008
        %v1019 = vmul.f32 %v1008, %v1018
        %vm1020 = vcmp.eq.f32.partialorder %v1008, inf
        %v1021 = vsel %vm1020, %v1008, %v1019
        %vm1022 = vcmp.eq.f32.partialorder %v1008, 0.0
        %v1023 = vand.u32 %v1008, 2147483648
        %v1024 = vsel %vm1022, %v1023, %v1021
        %v1025 = vrsqrt.pop %v1009
        %v1026 = vmul.f32 %v1009, %v1025
        %vm1027 = vcmp.eq.f32.partialorder %v1009, inf
        %v1028 = vsel %vm1027, %v1009, %v1026
        %vm1029 = vcmp.eq.f32.partialorder %v1009, 0.0
        %v1030 = vand.u32 %v1009, 2147483648
        %v1031 = vsel %vm1029, %v1030, %v1028
        %v1032 = vrsqrt.pop %v1010
        %v1033 = vmul.f32 %v1010, %v1032
        %vm1034 = vcmp.eq.f32.partialorder %v1010, inf
        %v1035 = vsel %vm1034, %v1010, %v1033
        %vm1036 = vcmp.eq.f32.partialorder %v1010, 0.0
        %v1037 = vand.u32 %v1010, 2147483648
        %v1038 = vsel %vm1036, %v1037, %v1035
        %v1039 = vadd.f32 %v337, 0.0
        %v1040 = vadd.f32 %v344, 0.0
        %v1041 = vadd.f32 %v351, 0.0
        %v1042 = vadd.f32 %v358, 0.0
        %v1043 = vadd.f32 %v1039, %v441
        %v1044 = vadd.f32 %v1040, %v448
        %v1045 = vadd.f32 %v1041, %v455
        %v1046 = vadd.f32 %v1042, %v462
        %v1047 = vadd.f32 %v1043, %v537
        %v1048 = vadd.f32 %v1044, %v544
        %v1049 = vadd.f32 %v1045, %v551
        %v1050 = vadd.f32 %v1046, %v558
        %v1051 = vadd.f32 %v1047, %v633
        %v1052 = vadd.f32 %v1048, %v640
        %v1053 = vadd.f32 %v1049, %v647
        %v1054 = vadd.f32 %v1050, %v654
        %v1055 = vadd.f32 %v1051, %v729
        %v1056 = vadd.f32 %v1052, %v736
        %v1057 = vadd.f32 %v1053, %v743
        %v1058 = vadd.f32 %v1054, %v750
        %v1059 = vadd.f32 %v1055, %v825
        %v1060 = vadd.f32 %v1056, %v832
        %v1061 = vadd.f32 %v1057, %v839
        %v1062 = vadd.f32 %v1058, %v846
        %v1063 = vadd.f32 %v1059, %v921
        %v1064 = vadd.f32 %v1060, %v928
        %v1065 = vadd.f32 %v1061, %v935
        %v1066 = vadd.f32 %v1062, %v942
        %v1067 = vadd.f32 %v1063, %v1017
        %v1068 = vadd.f32 %v1064, %v1024
        %v1069 = vadd.f32 %v1065, %v1031
        %v1070 = vadd.f32 %v1066, %v1038
        %v1071 = vmul.f32 %v1067, 0.125
        %v1072 = vmul.f32 %v1068, 0.125
        %v1073 = vmul.f32 %v1069, 0.125
        %v1074 = vmul.f32 %v1070, 0.125
        %v1075 = vsub.f32 %v337, %v1071
        %v1076 = vsub.f32 %v344, %v1072
        %v1077 = vsub.f32 %v351, %v1073
        %v1078 = vsub.f32 %v358, %v1074
        %v1079 = vmul.f32 %v1075, %v1075
        %v1080 = vmul.f32 %v1076, %v1076
        %v1081 = vmul.f32 %v1077, %v1077
        %v1082 = vmul.f32 %v1078, %v1078
        %v1083 = vadd.f32 %v1079, 0.0
        %v1084 = vadd.f32 %v1080, 0.0
        %v1085 = vadd.f32 %v1081, 0.0
        %v1086 = vadd.f32 %v1082, 0.0
        %v1087 = vsub.f32 %v441, %v1071
        %v1088 = vsub.f32 %v448, %v1072
        %v1089 = vsub.f32 %v455, %v1073
        %v1090 = vsub.f32 %v462, %v1074
        %v1091 = vmul.f32 %v1087, %v1087
        %v1092 = vmul.f32 %v1088, %v1088
        %v1093 = vmul.f32 %v1089, %v1089
        %v1094 = vmul.f32 %v1090, %v1090
        %v1095 = vadd.f32 %v1083, %v1091
        %v1096 = vadd.f32 %v1084, %v1092
        %v1097 = vadd.f32 %v1085, %v1093
        %v1098 = vadd.f32 %v1086, %v1094
        %v1099 = vsub.f32 %v537, %v1071
        %v1100 = vsub.f32 %v544, %v1072
        %v1101 = vsub.f32 %v551, %v1073
        %v1102 = vsub.f32 %v558, %v1074
        %v1103 = vmul.f32 %v1099, %v1099
        %v1104 = vmul.f32 %v1100, %v1100
        %v1105 = vmul.f32 %v1101, %v1101
        %v1106 = vmul.f32 %v1102, %v1102
        %v1107 = vadd.f32 %v1095, %v1103
        %v1108 = vadd.f32 %v1096, %v1104
        %v1109 = vadd.f32 %v1097, %v1105
        %v1110 = vadd.f32 %v1098, %v1106
        %v1111 = vsub.f32 %v633, %v1071
        %v1112 = vsub.f32 %v640, %v1072
        %v1113 = vsub.f32 %v647, %v1073
        %v1114 = vsub.f32 %v654, %v1074
        %v1115 = vmul.f32 %v1111, %v1111
        %v1116 = vmul.f32 %v1112, %v1112
        %v1117 = vmul.f32 %v1113, %v1113
        %v1118 = vmul.f32 %v1114, %v1114
        %v1119 = vadd.f32 %v1107, %v1115
        %v1120 = vadd.f32 %v1108, %v1116
        %v1121 = vadd.f32 %v1109, %v1117
        %v1122 = vadd.f32 %v1110, %v1118
        %v1123 = vsub.f32 %v729, %v1071
        %v1124 = vsub.f32 %v736, %v1072
        %v1125 = vsub.f32 %v743, %v1073
        %v1126 = vsub.f32 %v750, %v1074
        %v1127 = vmul.f32 %v1123, %v1123
        %v1128 = vmul.f32 %v1124, %v1124
        %v1129 = vmul.f32 %v1125, %v1125
        %v1130 = vmul.f32 %v1126, %v1126
        %v1131 = vadd.f32 %v1119, %v1127
        %v1132 = vadd.f32 %v1120, %v1128
        %v1133 = vadd.f32 %v1121, %v1129
        %v1134 = vadd.f32 %v1122, %v1130
        %v1135 = vsub.f32 %v825, %v1071
        %v1136 = vsub.f32 %v832, %v1072
        %v1137 = vsub.f32 %v839, %v1073
        %v1138 = vsub.f32 %v846, %v1074
        %v1139 = vmul.f32 %v1135, %v1135
        %v1140 = vmul.f32 %v1136, %v1136
        %v1141 = vmul.f32 %v1137, %v1137
        %v1142 = vmul.f32 %v1138, %v1138
        %v1143 = vadd.f32 %v1131, %v1139
        %v1144 = vadd.f32 %v1132, %v1140
        %v1145 = vadd.f32 %v1133, %v1141
        %v1146 = vadd.f32 %v1134, %v1142
        %v1147 = vsub.f32 %v921, %v1071
        %v1148 = vsub.f32 %v928, %v1072
        %v1149 = vsub.f32 %v935, %v1073
        %v1150 = vsub.f32 %v942, %v1074
        %v1151 = vmul.f32 %v1147, %v1147
        %v1152 = vmul.f32 %v1148, %v1148
        %v1153 = vmul.f32 %v1149, %v1149
        %v1154 = vmul.f32 %v1150, %v1150
        %v1155 = vadd.f32 %v1143, %v1151
        %v1156 = vadd.f32 %v1144, %v1152
        %v1157 = vadd.f32 %v1145, %v1153
        %v1158 = vadd.f32 %v1146, %v1154
        %v1159 = vsub.f32 %v1017, %v1071
        %v1160 = vsub.f32 %v1024, %v1072
        %v1161 = vsub.f32 %v1031, %v1073
        %v1162 = vsub.f32 %v1038, %v1074
        %v1163 = vmul.f32 %v1159, %v1159
        %v1164 = vmul.f32 %v1160, %v1160
        %v1165 = vmul.f32 %v1161, %v1161
        %v1166 = vmul.f32 %v1162, %v1162
        %v1167 = vadd.f32 %v1155, %v1163
        %v1168 = vadd.f32 %v1156, %v1164
        %v1169 = vadd.f32 %v1157, %v1165
        %v1170 = vadd.f32 %v1158, %v1166
        %v1171 = vmul.f32 %v1167, 0.14285715
        %v1172 = vmul.f32 %v1168, 0.14285715
        %v1173 = vmul.f32 %v1169, 0.14285715
        %v1174 = vmul.f32 %v1170, 0.14285715
        %v1175 = vrsqrt.pop %v1171
        %v1176 = vmul.f32 %v1171, %v1175
        %vm1177 = vcmp.eq.f32.partialorder %v1171, inf
        %v1178 = vsel %vm1177, %v1171, %v1176
        %vm1179 = vcmp.eq.f32.partialorder %v1171, 0.0
        %v1180 = vand.u32 %v1171, 2147483648
        %v1181 = vsel %vm1179, %v1180, %v1178
        %v1182 = vrsqrt.pop %v1172
        %v1183 = vmul.f32 %v1172, %v1182
        %vm1184 = vcmp.eq.f32.partialorder %v1172, inf
        %v1185 = vsel %vm1184, %v1172, %v1183
        %vm1186 = vcmp.eq.f32.partialorder %v1172, 0.0
        %v1187 = vand.u32 %v1172, 2147483648
        %v1188 = vsel %vm1186, %v1187, %v1185
        %v1189 = vrsqrt.pop %v1173
        %v1190 = vmul.f32 %v1173, %v1189
        %vm1191 = vcmp.eq.f32.partialorder %v1173, inf
        %v1192 = vsel %vm1191, %v1173, %v1190
        %vm1193 = vcmp.eq.f32.partialorder %v1173, 0.0
        %v1194 = vand.u32 %v1173, 2147483648
        %v1195 = vsel %vm1193, %v1194, %v1192
        %v1196 = vrsqrt.pop %v1174
        %v1197 = vmul.f32 %v1174, %v1196
        %vm1198 = vcmp.eq.f32.partialorder %v1174, inf
        %v1199 = vsel %vm1198, %v1174, %v1197
        %vm1200 = vcmp.eq.f32.partialorder %v1174, 0.0
        %v1201 = vand.u32 %v1174, 2147483648
        %v1202 = vsel %vm1200, %v1201, %v1199
        %v1203 = vsel %vm233, %v1181, 0.0
        %v1204 = vrot.slane %v1203, 4
        %v1205 = vadd.f32 %v1203, %v1204
        %v1206 = vrot.slane %v1205, 2
        %v1207 = vadd.f32 %v1205, %v1206
        %v1208 = vrot.slane %v1207, 1
        %v1209 = vadd.f32 %v1207, %v1208
        %v1210 = vsel %vm233, %v1188, 0.0
        %v1211 = vrot.slane %v1210, 4
        %v1212 = vadd.f32 %v1210, %v1211
        %v1213 = vrot.slane %v1212, 2
        %v1214 = vadd.f32 %v1212, %v1213
        %v1215 = vrot.slane %v1214, 1
        %v1216 = vadd.f32 %v1214, %v1215
        %v1217 = vsel %vm233, %v1195, 0.0
        %v1218 = vrot.slane %v1217, 4
        %v1219 = vadd.f32 %v1217, %v1218
        %v1220 = vrot.slane %v1219, 2
        %v1221 = vadd.f32 %v1219, %v1220
        %v1222 = vrot.slane %v1221, 1
        %v1223 = vadd.f32 %v1221, %v1222
        %v1224 = vsel %vm233, %v1202, 0.0
        %v1225 = vrot.slane %v1224, 4
        %v1226 = vadd.f32 %v1224, %v1225
        %v1227 = vrot.slane %v1226, 2
        %v1228 = vadd.f32 %v1226, %v1227
        %v1229 = vrot.slane %v1228, 1
        %v1230 = vadd.f32 %v1228, %v1229
        %v1231 = vmul.f32 %v1209, 0.25
        %v1232 = vmul.f32 %v1216, 0.25
        %v1233 = vmul.f32 %v1223, 0.25
        %v1234 = vmul.f32 %v1230, 0.25
        %v1235 = vsub.f32 %v1181, %v1231
        %v1236 = vsub.f32 %v1188, %v1232
        %v1237 = vsub.f32 %v1195, %v1233
        %v1238 = vsub.f32 %v1202, %v1234
        %v1239 = vmul.f32 %v1235, %v1235
        %v1240 = vmul.f32 %v1236, %v1236
        %v1241 = vmul.f32 %v1237, %v1237
        %v1242 = vmul.f32 %v1238, %v1238
        %v1243 = vsel %vm233, %v1239, 0.0
        %v1244 = vrot.slane %v1243, 4
        %v1245 = vadd.f32 %v1243, %v1244
        %v1246 = vrot.slane %v1245, 2
        %v1247 = vadd.f32 %v1245, %v1246
        %v1248 = vrot.slane %v1247, 1
        %v1249 = vadd.f32 %v1247, %v1248
        %v1250 = vsel %vm233, %v1240, 0.0
        %v1251 = vrot.slane %v1250, 4
        %v1252 = vadd.f32 %v1250, %v1251
        %v1253 = vrot.slane %v1252, 2
        %v1254 = vadd.f32 %v1252, %v1253
        %v1255 = vrot.slane %v1254, 1
        %v1256 = vadd.f32 %v1254, %v1255
        %v1257 = vsel %vm233, %v1241, 0.0
        %v1258 = vrot.slane %v1257, 4
        %v1259 = vadd.f32 %v1257, %v1258
        %v1260 = vrot.slane %v1259, 2
        %v1261 = vadd.f32 %v1259, %v1260
        %v1262 = vrot.slane %v1261, 1
        %v1263 = vadd.f32 %v1261, %v1262
        %v1264 = vsel %vm233, %v1242, 0.0
        %v1265 = vrot.slane %v1264, 4
        %v1266 = vadd.f32 %v1264, %v1265
        %v1267 = vrot.slane %v1266, 2
        %v1268 = vadd.f32 %v1266, %v1267
        %v1269 = vrot.slane %v1268, 1
        %v1270 = vadd.f32 %v1268, %v1269
        %v1271 = vmul.f32 %v1249, 0.33333334
        %v1272 = vmul.f32 %v1256, 0.33333334
        %v1273 = vmul.f32 %v1263, 0.33333334
        %v1274 = vmul.f32 %v1270, 0.33333334
        %v1275 = vadd.f32 %v1271, 1e-08
        %v1276 = vadd.f32 %v1272, 1e-08
        %v1277 = vadd.f32 %v1273, 1e-08
        %v1278 = vadd.f32 %v1274, 1e-08
        %v1279 = vrsqrt.pop %v1275
        %v1280 = vmul.f32 %v1275, %v1279
        %vm1281 = vcmp.eq.f32.partialorder %v1275, inf
        %v1282 = vsel %vm1281, %v1275, %v1280
        %vm1283 = vcmp.eq.f32.partialorder %v1275, 0.0
        %v1284 = vand.u32 %v1275, 2147483648
        %v1285 = vsel %vm1283, %v1284, %v1282
        %v1286 = vrsqrt.pop %v1276
        %v1287 = vmul.f32 %v1276, %v1286
        %vm1288 = vcmp.eq.f32.partialorder %v1276, inf
        %v1289 = vsel %vm1288, %v1276, %v1287
        %vm1290 = vcmp.eq.f32.partialorder %v1276, 0.0
        %v1291 = vand.u32 %v1276, 2147483648
        %v1292 = vsel %vm1290, %v1291, %v1289
        %v1293 = vrsqrt.pop %v1277
        %v1294 = vmul.f32 %v1277, %v1293
        %vm1295 = vcmp.eq.f32.partialorder %v1277, inf
        %v1296 = vsel %vm1295, %v1277, %v1294
        %vm1297 = vcmp.eq.f32.partialorder %v1277, 0.0
        %v1298 = vand.u32 %v1277, 2147483648
        %v1299 = vsel %vm1297, %v1298, %v1296
        %v1300 = vrsqrt.pop %v1278
        %v1301 = vmul.f32 %v1278, %v1300
        %vm1302 = vcmp.eq.f32.partialorder %v1278, inf
        %v1303 = vsel %vm1302, %v1278, %v1301
        %vm1304 = vcmp.eq.f32.partialorder %v1278, 0.0
        %v1305 = vand.u32 %v1278, 2147483648
        %v1306 = vsel %vm1304, %v1305, %v1303
        %v1307 = vrcp.pop %v1285
        %v1308 = vmul.f32 1.0, %v1307
        %v1309 = vrcp.pop %v1292
        %v1310 = vmul.f32 1.0, %v1309
        %v1311 = vrcp.pop %v1299
        %v1312 = vmul.f32 1.0, %v1311
        %v1313 = vrcp.pop %v1306
        %v1314 = vmul.f32 1.0, %v1313
        %v1315 = vld [vmem:[%s221] sm:$0x1]
        %v1316 = vld [vmem:[%s221 + $0x1] sm:$0x1]
        %v1317 = vld [vmem:[%s221 + $0x2] sm:$0x1]
        %v1318 = vld [vmem:[%s221 + $0x3] sm:$0x1]
        %v1319 = vmul.f32 %v1315, %v1308
        %v1320 = vmul.f32 %v1316, %v1310
        %v1321 = vmul.f32 %v1317, %v1312
        %v1322 = vmul.f32 %v1318, %v1314
        %v1323 = vld [vmem:[%s226] sm:$0x1]
        %v1324 = vld [vmem:[%s226 + $0x1] sm:$0x1]
        %v1325 = vld [vmem:[%s226 + $0x2] sm:$0x1]
        %v1326 = vld [vmem:[%s226 + $0x3] sm:$0x1]
        %v1327 = vmul.f32 %v274, %v1319
        %v1328 = vmul.f32 %v275, %v1320
        %v1329 = vmul.f32 %v276, %v1321
        %v1330 = vmul.f32 %v277, %v1322
        %v1331 = vsub.f32 %v1323, %v1327
        %v1332 = vsub.f32 %v1324, %v1328
        %v1333 = vsub.f32 %v1325, %v1329
        %v1334 = vsub.f32 %v1326, %v1330
        %v1339 = vlaneseq
        %v1340 = vshrl.u32 %v1339, 7
        %v1341 = vsub.s32 0, %v1340
        %v1342 = vrot.slane %v1319, %v1341
        %v1343 = vlaneseq
        %v1344 = vshrl.u32 %v1343, 7
        %v1345 = vsub.s32 0, %v1344
        %v1346 = vrot.slane %v1320, %v1345
        %v1347 = vlaneseq
        %v1348 = vshrl.u32 %v1347, 7
        %v1349 = vsub.s32 0, %v1348
        %v1350 = vrot.slane %v1321, %v1349
        %v1351 = vlaneseq
        %v1352 = vshrl.u32 %v1351, 7
        %v1353 = vsub.s32 0, %v1352
        %v1354 = vrot.slane %v1322, %v1353
        %1355 = vset.pattern.permute.xlu0 0
        %1356 = vperm.xlu0 %1355, %v1342
        %v1357 = vpop.permute.xlu0 %1356
        %1359 = vset.pattern.permute.xlu0 0
        %1360 = vperm.xlu0 %1359, %v1346
        %v1361 = vpop.permute.xlu0 %1360
        %1363 = vset.pattern.permute.xlu0 0
        %1364 = vperm.xlu0 %1363, %v1350
        %v1365 = vpop.permute.xlu0 %1364
        %1367 = vset.pattern.permute.xlu0 0
        %1368 = vperm.xlu0 %1367, %v1354
        %v1369 = vpop.permute.xlu0 %1368
        %v1371 = vmul.f32 %v229, %v1357
        %v1372 = vmul.f32 %v230, %v1361
        %v1373 = vmul.f32 %v231, %v1365
        %v1374 = vmul.f32 %v232, %v1369
        %v1379 = vlaneseq
        %v1380 = vshrl.u32 %v1379, 7
        %v1381 = vsub.s32 0, %v1380
        %v1382 = vrot.slane %v1331, %v1381
        %v1383 = vlaneseq
        %v1384 = vshrl.u32 %v1383, 7
        %v1385 = vsub.s32 0, %v1384
        %v1386 = vrot.slane %v1332, %v1385
        %v1387 = vlaneseq
        %v1388 = vshrl.u32 %v1387, 7
        %v1389 = vsub.s32 0, %v1388
        %v1390 = vrot.slane %v1333, %v1389
        %v1391 = vlaneseq
        %v1392 = vshrl.u32 %v1391, 7
        %v1393 = vsub.s32 0, %v1392
        %v1394 = vrot.slane %v1334, %v1393
        %1395 = vset.pattern.permute.xlu0 0
        %1396 = vperm.xlu0 %1395, %v1382
        %v1397 = vpop.permute.xlu0 %1396
        %1399 = vset.pattern.permute.xlu0 0
        %1400 = vperm.xlu0 %1399, %v1386
        %v1401 = vpop.permute.xlu0 %1400
        %1403 = vset.pattern.permute.xlu0 0
        %1404 = vperm.xlu0 %1403, %v1390
        %v1405 = vpop.permute.xlu0 %1404
        %1407 = vset.pattern.permute.xlu0 0
        %1408 = vperm.xlu0 %1407, %v1394
        %v1409 = vpop.permute.xlu0 %1408
        %v1411 = vadd.f32 %v1371, %v1397
        %v1412 = vadd.f32 %v1372, %v1401
        %v1413 = vadd.f32 %v1373, %v1405
        %v1414 = vadd.f32 %v1374, %v1409
        %1415 = vst [vmem:[%s216] sm:$0xf] %v1411
        %1416 = vst [vmem:[%s216 + $0x4] sm:$0xf] %v1412
        %1417 = vst [vmem:[%s216 + $0x8] sm:$0xf] %v1413
        %1418 = vst [vmem:[%s216 + $0xc] sm:$0xf] %v1414
        %s1419 = sand.u32 %s106, 1
        %s1420 = scalar_lea.sflag [#allocation4], %s1419
        %s1421 = sand.u32 %s106, 1
        %s1422 = smul.addr %s1421, 16
        %s1423 = scalar_lea.vmem [#allocation5], %s1422
        // Predicated region
        $region37: #{tpu_custom_call.1} parent=31 // pred_check
          %p1424 = pneg %p116
        $region38: #{tpu_custom_call.1} parent=31 // pred_check_branch
          %1426 = sbr.rel (%p1424) target = $region40
        $region39: #{tpu_custom_call.1} parent=31 // pred_region
          %s1427 = smul.u32 4, %s20
          %s1429 = ssub.s32 256, 256
          %1430 = vsyncadd %s1420, %s1429
          %s1431 = smul.addr %s1427, 64
          %s1432 = scalar_lea.hbm %s3, %s1431
          %s1433 = sshll.u32 %s1423, 4
          %s1434 = int_to_ptr.vmem [resolvable:$true] %s1433
          %1439 = dma.vmem_to_hbm [thread:$0]  %s1434, 256, %s1432, %s1420, 64, 64, 4
        $region40: #{tpu_custom_call.1} parent=31 // pred_fallthru
          _
      $region32: #{tpu_custom_call.1} parent=5 // pred_fallthru
        _
      %p1440 = scmp.le.s32.totalorder 2, %s15
      // Predicated region
      $region41: #{tpu_custom_call.1} parent=5 // pred_check
        %p1441 = pneg %p1440
      $region42: #{tpu_custom_call.1} parent=5 // pred_check_branch
        %1443 = sbr.rel (%p1441) target = $region44
      $region43: #{tpu_custom_call.1} parent=5 // pred_region
        %s1444 = ssub.s32 %s15, 2
        // Predicated region
        $region45: #{tpu_custom_call.1} parent=43 // pred_check
          %p1445 = pneg %p122
        $region46: #{tpu_custom_call.1} parent=43 // pred_check_branch
          %1447 = sbr.rel (%p1445) target = $region48
        $region47: #{tpu_custom_call.1} parent=43 // pred_region
          %s1448 = sand.u32 %s107, 1
          %s1449 = scalar_lea.sflag [#allocation4], %s1448
          %s1450 = sand.u32 %s107, 1
          %s1451 = smul.addr %s1450, 16
          %s1452 = scalar_lea.vmem [#allocation5], %s1451
          %1453 = dma.done %s1449, 256
        $region48: #{tpu_custom_call.1} parent=43 // pred_fallthru
          _
      $region44: #{tpu_custom_call.1} parent=5 // pred_fallthru
        _
    $region6: #{tpu_custom_call.1} parent=1 // loop_footer
      %s19 = sadd.s32 1, %s15
    $region7: #{tpu_custom_call.1} parent=1 // loop_footer_branch
      %14 = sbr.rel target = $region3
    $region8: #{tpu_custom_call.1} parent=1 // loop_exit
      _
    %1454 = vsyncpa [#allocation3], 1
    %s1455 = scalar_lea.sflag [#allocation3], 1
    %1456 = vsyncpa %s1455, 1
    %1457 = vsyncpa [#allocation4], 1
    %s1458 = scalar_lea.sflag [#allocation4], 1
    %1459 = vsyncpa %s1458, 1

</llo_original>
